<compile_context>
chip_gen: v6e
topology: v6e:2x2x1
jax: 0.10.0
libtpu: 0.0.40
codegen_flags: <defaults>
</compile_context>

<pallas_src>
import numpy as np
import jax
import jax.numpy as jnp
from jax.experimental import pallas as pl
from jax.experimental.pallas import tpu as pltpu

# ----------------------------- configuration ------------------------------
B = 2           # batch
F_MELS = 16     # spectrogram frequency bins (feature dim after permute)
T_SEQ = 8       # time steps (sequence length after permute)
D_MODEL = 32    # encoder.model_dim
N_HEADS = 4     # attention heads in the stand-in encoder
D_HEAD = D_MODEL // N_HEADS
D_FFN = 64      # encoder feed-forward dim
HIDDEN = 32     # readout hidden_dim (module default 256; kept small here)
N_CLASSES = 94  # module default n_classes
STAT_DIM = 8    # stat_feat dim (unpacked but unused, as in the PyTorch code)

BT = B * T_SEQ
_LN_EPS = 1e-5

# ------------------------- packed-parameter layout --------------------------
# Every matrix (weights AND static attention masks) occupies a row-block whose
# row count is a multiple of 8; every bias / LN vector occupies one row;
# everything padded to 128 lanes -> two input DMAs total (spec + slab).
_WEIGHT_SHAPES = (
    ("w_in",  (F_MELS, D_MODEL)),
    ("wqkv",  (D_MODEL, 3 * D_MODEL)),    # fused Q/K/V, 1/sqrt(d) folded into Q
    ("wo",    (D_MODEL, D_MODEL)),
    ("wff1",  (D_MODEL, D_FFN)),
    ("wff2",  (D_FFN, D_MODEL)),
    ("w1",    (D_MODEL, HIDDEN)),
    ("w2",    (HIDDEN, HIDDEN)),
    ("w3",    (HIDDEN, N_CLASSES)),
    ("hmask", (N_HEADS * BT, D_MODEL)),   # static head block-mask
    ("bmask", (BT, N_HEADS * BT)),        # static batch block-diagonal mask
)
_BIAS_WIDTHS = (
    ("b_in", D_MODEL), ("bqkv", 3 * D_MODEL), ("bo", D_MODEL),
    ("g1", D_MODEL), ("be1", D_MODEL),
    ("bff1", D_FFN), ("bff2", D_MODEL),
    ("g2", D_MODEL), ("be2", D_MODEL),
    ("b1", HIDDEN), ("b2", HIDDEN), ("b3", N_CLASSES),
)
SLAB_LANES = 128


def _round8(n):
    return ((n + 7) // 8) * 8


def _build_layout():
    wrow, r = {}, 0
    for name, shape in _WEIGHT_SHAPES:
        wrow[name] = r
        r += _round8(shape[0])
    brow = {name: r + i for i, (name, _) in enumerate(_BIAS_WIDTHS)}
    return wrow, brow, _round8(r + len(_BIAS_WIDTHS))


_WROW, _BROW, SLAB_ROWS = _build_layout()
_WSHAPE = dict(_WEIGHT_SHAPES)
_BWIDTH = dict(_BIAS_WIDTHS)


# ------------------------- static mask construction -------------------------
def _build_head_mask():
    """(N_HEADS*BT, D_MODEL): row block h is 1 on head-h's lane block."""
    m = np.zeros((N_HEADS * BT, D_MODEL), np.float32)
    for h in range(N_HEADS):
        m[h * BT:(h + 1) * BT, h * D_HEAD:(h + 1) * D_HEAD] = 1.0
    return m


def _build_batch_mask():
    """(BT, N_HEADS*BT): 1 where query and key belong to the same example."""
    same = (np.arange(BT)[:, None] // T_SEQ) == (np.arange(BT)[None, :] // T_SEQ)
    return np.tile(same.astype(np.float32), (1, N_HEADS))


# ------------------------------ small helpers -------------------------------
def _dot(a, b):
    return jnp.dot(a, b, preferred_element_type=jnp.float32)


def _layer_norm(x, gamma, beta):
    mu = jnp.mean(x, axis=-1, keepdims=True)
    var = jnp.mean(jnp.square(x - mu), axis=-1, keepdims=True)
    return (x - mu) * jax.lax.rsqrt(var + _LN_EPS) * gamma + beta


def _weight(slab_ref, name):
    r = _WROW[name]
    rows, cols = _WSHAPE[name]
    return slab_ref[r:r + rows, 0:cols]


def _bias(slab_ref, name):
    r = _BROW[name]
    return slab_ref[r:r + 1, 0:_BWIDTH[name]]   # (1, width), broadcasts over rows


# ------------------------------ Pallas kernel -------------------------------
def classifier_kernel(spec_ref, slab_ref, out_ref):
    # ---- permute(0,2,1) in-kernel (XLU) + ONE input-projection matmul
    x = spec_ref[...]                                       # (B, F, T)
    x_bt = jnp.concatenate([x[b].T for b in range(B)], axis=0)   # (B*T, F)
    h = _dot(x_bt, _weight(slab_ref, "w_in")) + _bias(slab_ref, "b_in")  # (BT, D)

    # ---- fused QKV projection (1/sqrt(d_head) pre-folded into the Q columns)
    qkv = _dot(h, _weight(slab_ref, "wqkv")) + _bias(slab_ref, "bqkv")   # (BT, 3D)
    q = qkv[:, 0:D_MODEL]
    k = qkv[:, D_MODEL:2 * D_MODEL]
    v = qkv[:, 2 * D_MODEL:3 * D_MODEL]

    # ---- all heads at once via static masks (no per-head loop, no lane-offset
    # activation slices, no cross-lane softmax reduces, single exp).
    hmask = _weight(slab_ref, "hmask")                      # (H*BT, D) constant
    bmask = _weight(slab_ref, "bmask")                      # (BT, H*BT) constant
    k_bd = jnp.tile(k, (N_HEADS, 1)) * hmask                # (H*BT, D) head-masked K
    v_bd = jnp.tile(v, (N_HEADS, 1)) * hmask                # (H*BT, D) head-masked V

    # scores: S[t, h*BT+s] = Q_h[t] . K_h[s]   (Q already scaled by 1/sqrt(d))
    s = jax.lax.dot_general(q, k_bd, (((1,), (1,)), ((), ())),
                            preferred_element_type=jnp.float32)          # (BT, H*BT)
    # scores are small/bounded here -> no max-subtraction; batch mask is a
    # multiplicative {0,1} mask on exp(s), so nothing large ever reaches exp.
    p = jnp.exp(s) * bmask                                  # unnormalized probs
    den = _dot(p, hmask)                                    # per-head softmax denom,
                                                            # broadcast over head lanes
    ctx = _dot(p, v_bd) / den                               # (BT, D), heads along lanes
    att = _dot(ctx, _weight(slab_ref, "wo")) + _bias(slab_ref, "bo")     # fused W_O

    # ---- add & norm 1
    h1 = _layer_norm(h + att, _bias(slab_ref, "g1"), _bias(slab_ref, "be1"))

    # ---- feed-forward + add & norm 2
    ff = jax.nn.relu(_dot(h1, _weight(slab_ref, "wff1")) + _bias(slab_ref, "bff1"))
    ff = _dot(ff, _weight(slab_ref, "wff2")) + _bias(slab_ref, "bff2")
    h2 = _layer_norm(h1 + ff, _bias(slab_ref, "g2"), _bias(slab_ref, "be2"))

    # ---- readout: Linear -> ReLU -> Linear -> ReLU -> Dropout(id) -> Linear
    r = jax.nn.relu(_dot(h2, _weight(slab_ref, "w1")) + _bias(slab_ref, "b1"))
    r = jax.nn.relu(_dot(r, _weight(slab_ref, "w2")) + _bias(slab_ref, "b2"))
    # Dropout(0.1): identity in eval/inference mode.
    out = _dot(r, _weight(slab_ref, "w3")) + _bias(slab_ref, "b3")        # (BT, C)

    out_ref[...] = out.astype(out_ref.dtype)


# ------------------------------ wrapper (glue) -----------------------------
@jax.jit
def classifier_forward(spec_feat, stat_feat, slab):
    """spec_feat: (B, F, T); stat_feat unpacked-but-unused, as in PyTorch."""
    del stat_feat
    # Single invocation, no grid: whole problem (~190 KiB) is VMEM-resident on
    # v5e/v6e (128 MiB) and v7x (64 MiB).  Explicit VMEM placement per review.
    out_flat = pl.pallas_call(
        classifier_kernel,
        out_shape=jax.ShapeDtypeStruct((BT, N_CLASSES), jnp.float32),
        in_specs=[pl.BlockSpec(memory_space=pltpu.MemorySpace.VMEM),
                  pl.BlockSpec(memory_space=pltpu.MemorySpace.VMEM)],
        out_specs=pl.BlockSpec(memory_space=pltpu.MemorySpace.VMEM),
    )(spec_feat, slab)
    return out_flat.reshape(B, T_SEQ, N_CLASSES)


def pack_params(p):
    """Pack all parameters + static masks into one (SLAB_ROWS, 128) f32 slab."""
    scale = jnp.float32(D_HEAD ** -0.5)
    mats = {
        "w_in": p["w_in"],
        "wqkv": jnp.concatenate([p["wq"] * scale, p["wk"], p["wv"]], axis=1),
        "wo": p["wo"], "wff1": p["wff1"], "wff2": p["wff2"],
        "w1": p["w1"], "w2": p["w2"], "w3": p["w3"],
        "hmask": jnp.asarray(_build_head_mask()),
        "bmask": jnp.asarray(_build_batch_mask()),
    }
    vecs = {
        "b_in": p["b_in"],
        "bqkv": jnp.concatenate([p["bq"] * scale, p["bk"], p["bv"]], axis=1),
        "bo": p["bo"], "g1": p["g1"], "be1": p["be1"],
        "bff1": p["bff1"], "bff2": p["bff2"], "g2": p["g2"], "be2": p["be2"],
        "b1": p["b1"], "b2": p["b2"], "b3": p["b3"],
    }
    slab = jnp.zeros((SLAB_ROWS, SLAB_LANES), jnp.float32)
    for name, (rows, cols) in _WEIGHT_SHAPES:
        r = _WROW[name]
        slab = slab.at[r:r + rows, 0:cols].set(mats[name].astype(jnp.float32))
    for name, cols in _BIAS_WIDTHS:
        r = _BROW[name]
        slab = slab.at[r, 0:cols].set(vecs[name].reshape(-1).astype(jnp.float32))
    return slab


# --------------------------- reference (plain JAX) --------------------------
def classifier_reference(spec_feat, params):
    x = jnp.transpose(spec_feat, (0, 2, 1)).astype(jnp.float32)  # (B, T, F)
    p = params
    h = jnp.einsum("btf,fd->btd", x, p["w_in"]) + p["b_in"]
    q = jnp.einsum("btd,de->bte", h, p["wq"]) + p["bq"]
    k = jnp.einsum("btd,de->bte", h, p["wk"]) + p["bk"]
    v = jnp.einsum("btd,de->bte", h, p["wv"]) + p["bv"]
    qh = q.reshape(B, T_SEQ, N_HEADS, D_HEAD)
    kh = k.reshape(B, T_SEQ, N_HEADS, D_HEAD)
    vh = v.reshape(B, T_SEQ, N_HEADS, D_HEAD)
    s = jnp.einsum("bqhd,bkhd->bhqk", qh, kh) / (D_HEAD ** 0.5)
    pr = jax.nn.softmax(s, axis=-1)
    att = jnp.einsum("bhqk,bkhd->bqhd", pr, vh).reshape(B, T_SEQ, D_MODEL)
    att = jnp.einsum("btd,de->bte", att, p["wo"]) + p["bo"]
    h1 = _layer_norm(h + att, p["g1"], p["be1"])
    ff = jax.nn.relu(jnp.einsum("btd,df->btf", h1, p["wff1"]) + p["bff1"])
    ff = jnp.einsum("btf,fd->btd", ff, p["wff2"]) + p["bff2"]
    h2 = _layer_norm(h1 + ff, p["g2"], p["be2"])
    r = jax.nn.relu(jnp.einsum("btd,dh->bth", h2, p["w1"]) + p["b1"])
    r = jax.nn.relu(jnp.einsum("bth,hk->btk", r, p["w2"]) + p["b2"])
    return jnp.einsum("bth,hc->btc", r, p["w3"]) + p["b3"]


# ------------------------------ param init ---------------------------------
def init_params(key):
    def dense(k, shape, scale):
        return jax.random.normal(k, shape, jnp.float32) * scale

    keys = jax.random.split(key, 16)
    p = {}
    p["w_in"] = dense(keys[0], (F_MELS, D_MODEL), F_MELS ** -0.5)
    p["b_in"] = jnp.zeros((1, D_MODEL), jnp.float32)
    p["wq"] = dense(keys[1], (D_MODEL, D_MODEL), D_MODEL ** -0.5)
    p["bq"] = jnp.zeros((1, D_MODEL), jnp.float32)
    p["wk"] = dense(keys[2], (D_MODEL, D_MODEL), D_MODEL ** -0.5)
    p["bk"] = jnp.zeros((1, D_MODEL), jnp.float32)
    p["wv"] = dense(keys[3], (D_MODEL, D_MODEL), D_MODEL ** -0.5)
    p["bv"] = jnp.zeros((1, D_MODEL), jnp.float32)
    p["wo"] = dense(keys[4], (D_MODEL, D_MODEL), D_MODEL ** -0.5)
    p["bo"] = jnp.zeros((1, D_MODEL), jnp.float32)
    p["g1"] = jnp.ones((1, D_MODEL), jnp.float32)
    p["be1"] = jnp.zeros((1, D_MODEL), jnp.float32)
    p["wff1"] = dense(keys[5], (D_MODEL, D_FFN), D_MODEL ** -0.5)
    p["bff1"] = jnp.zeros((1, D_FFN), jnp.float32)
    p["wff2"] = dense(keys[6], (D_FFN, D_MODEL), D_FFN ** -0.5)
    p["bff2"] = jnp.zeros((1, D_MODEL), jnp.float32)
    p["g2"] = jnp.ones((1, D_MODEL), jnp.float32)
    p["be2"] = jnp.zeros((1, D_MODEL), jnp.float32)
    p["w1"] = dense(keys[7], (D_MODEL, HIDDEN), D_MODEL ** -0.5)
    p["b1"] = dense(keys[8], (1, HIDDEN), 0.01)
    p["w2"] = dense(keys[9], (HIDDEN, HIDDEN), HIDDEN ** -0.5)
    p["b2"] = dense(keys[10], (1, HIDDEN), 0.01)
    p["w3"] = dense(keys[11], (HIDDEN, N_CLASSES), HIDDEN ** -0.5)
    p["b3"] = dense(keys[12], (1, N_CLASSES), 0.01)
    return p


# ----------------------------------- main -----------------------------------
if __name__ == "__main__":
    key = jax.random.PRNGKey(0)
    k_spec, k_stat, k_params = jax.random.split(key, 3)

    spec_feat = jax.random.normal(k_spec, (B, F_MELS, T_SEQ), jnp.float32)
    stat_feat = jax.random.normal(k_stat, (B, STAT_DIM), jnp.float32)
    params = init_params(k_params)
    slab = pack_params(params)        # one-time parameter packing (outside jit)

    out = jax.block_until_ready(classifier_forward(spec_feat, stat_feat, slab))
    ref = jax.block_until_ready(classifier_reference(spec_feat, params))

    assert out.shape == (B, T_SEQ, N_CLASSES), out.shape
    max_err = float(jnp.max(jnp.abs(out - ref)))
    assert jnp.allclose(out, ref, atol=2e-3, rtol=2e-3), max_err

    print("KERNEL_OK")
</pallas_src>

<mosaic_0001>
module attributes {stable_mosaic.version = 11 : i64} {
  func.func @classifier_kernel(%arg0: memref<2x16x8xf32, #tpu.memory_space<vmem>>, %arg1: memref<368x128xf32, #tpu.memory_space<vmem>>, %arg2: memref<16x94xf32, #tpu.memory_space<vmem>>) attributes {dimension_semantics = [], scalar_prefetch = 0 : i64, scratch_operands = 0 : i64, tpu.core_type = #tpu.core_type<tc>} {
    %c0 = arith.constant 0 : index
    %c0_0 = arith.constant 0 : index
    %c0_1 = arith.constant 0 : index
    %0 = vector.load %arg0[%c0, %c0_0, %c0_1] : memref<2x16x8xf32, #tpu.memory_space<vmem>>, vector<2x16x8xf32>
    %1 = vector.extract_strided_slice %0 {offsets = [0, 0, 0], sizes = [1, 16, 8], strides = [1, 1, 1]} : vector<2x16x8xf32> to vector<1x16x8xf32>
    %2 = vector.shape_cast %1 : vector<1x16x8xf32> to vector<16x8xf32>
    %3 = tpu.transpose %2, [1, 0] : vector<16x8xf32> -> vector<8x16xf32>
    %4 = vector.extract_strided_slice %0 {offsets = [1, 0, 0], sizes = [1, 16, 8], strides = [1, 1, 1]} : vector<2x16x8xf32> to vector<1x16x8xf32>
    %5 = vector.shape_cast %4 : vector<1x16x8xf32> to vector<16x8xf32>
    %6 = tpu.transpose %5, [1, 0] : vector<16x8xf32> -> vector<8x16xf32>
    %7 = tpu.concatenate %3, %6 in 0 : vector<8x16xf32>, vector<8x16xf32> -> vector<16x16xf32>
    %c0_2 = arith.constant 0 : index
    %c0_3 = arith.constant 0 : index
    %8 = vector.load %arg1[%c0_2, %c0_3] : memref<368x128xf32, #tpu.memory_space<vmem>>, vector<16x32xf32>
    %cst = arith.constant dense<0.000000e+00> : vector<16x32xf32>
    %9 = tpu.matmul %7, %8, %cst {dimension_numbers = #tpu.dot_dimension_numbers<[1], [0], [0], [1], [0, 0, 1, 1], [], []>} : vector<16x16xf32>, vector<16x32xf32>, vector<16x32xf32> -> vector<16x32xf32>
    %c352 = arith.constant 352 : index
    %c0_4 = arith.constant 0 : index
    %10 = vector.load %arg1[%c352, %c0_4] : memref<368x128xf32, #tpu.memory_space<vmem>>, vector<1x32xf32>
    %11 = vector.broadcast %10 : vector<1x32xf32> to vector<16x32xf32>
    %12 = arith.addf %9, %11 : vector<16x32xf32>
    %c16 = arith.constant 16 : index
    %c0_5 = arith.constant 0 : index
    %13 = vector.load %arg1[%c16, %c0_5] : memref<368x128xf32, #tpu.memory_space<vmem>>, vector<32x96xf32>
    %cst_6 = arith.constant dense<0.000000e+00> : vector<16x96xf32>
    %14 = tpu.matmul %12, %13, %cst_6 {dimension_numbers = #tpu.dot_dimension_numbers<[1], [0], [0], [1], [0, 0, 1, 1], [], []>} : vector<16x32xf32>, vector<32x96xf32>, vector<16x96xf32> -> vector<16x96xf32>
    %c353 = arith.constant 353 : index
    %c0_7 = arith.constant 0 : index
    %15 = vector.load %arg1[%c353, %c0_7] : memref<368x128xf32, #tpu.memory_space<vmem>>, vector<1x96xf32>
    %16 = vector.broadcast %15 : vector<1x96xf32> to vector<16x96xf32>
    %17 = arith.addf %14, %16 : vector<16x96xf32>
    %18 = vector.extract_strided_slice %17 {offsets = [0, 0], sizes = [16, 32], strides = [1, 1]} : vector<16x96xf32> to vector<16x32xf32>
    %19 = vector.extract_strided_slice %17 {offsets = [0, 32], sizes = [16, 32], strides = [1, 1]} : vector<16x96xf32> to vector<16x32xf32>
    %20 = vector.extract_strided_slice %17 {offsets = [0, 64], sizes = [16, 32], strides = [1, 1]} : vector<16x96xf32> to vector<16x32xf32>
    %c272 = arith.constant 272 : index
    %c0_8 = arith.constant 0 : index
    %21 = vector.load %arg1[%c272, %c0_8] : memref<368x128xf32, #tpu.memory_space<vmem>>, vector<64x32xf32>
    %c336 = arith.constant 336 : index
    %c0_9 = arith.constant 0 : index
    %22 = vector.load %arg1[%c336, %c0_9] : memref<368x128xf32, #tpu.memory_space<vmem>>, vector<16x64xf32>
    %23 = tpu.concatenate %19, %19, %19, %19 in 0 : vector<16x32xf32>, vector<16x32xf32>, vector<16x32xf32>, vector<16x32xf32> -> vector<64x32xf32>
    %24 = arith.mulf %23, %21 : vector<64x32xf32>
    %25 = tpu.concatenate %20, %20, %20, %20 in 0 : vector<16x32xf32>, vector<16x32xf32>, vector<16x32xf32>, vector<16x32xf32> -> vector<64x32xf32>
    %26 = arith.mulf %25, %21 : vector<64x32xf32>
    %cst_10 = arith.constant dense<0.000000e+00> : vector<16x64xf32>
    %27 = tpu.matmul %18, %24, %cst_10 {dimension_numbers = #tpu.dot_dimension_numbers<[1], [1], [0], [0], [0, 0, 1, 0], [], []>} : vector<16x32xf32>, vector<64x32xf32>, vector<16x64xf32> -> vector<16x64xf32>
    %28 = math.exp %27 : vector<16x64xf32>
    %29 = arith.mulf %28, %22 : vector<16x64xf32>
    %cst_11 = arith.constant dense<0.000000e+00> : vector<16x32xf32>
    %30 = tpu.matmul %29, %21, %cst_11 {dimension_numbers = #tpu.dot_dimension_numbers<[1], [0], [0], [1], [0, 0, 1, 1], [], []>} : vector<16x64xf32>, vector<64x32xf32>, vector<16x32xf32> -> vector<16x32xf32>
    %cst_12 = arith.constant dense<0.000000e+00> : vector<16x32xf32>
    %31 = tpu.matmul %29, %26, %cst_12 {dimension_numbers = #tpu.dot_dimension_numbers<[1], [0], [0], [1], [0, 0, 1, 1], [], []>} : vector<16x64xf32>, vector<64x32xf32>, vector<16x32xf32> -> vector<16x32xf32>
    %32 = arith.divf %31, %30 : vector<16x32xf32>
    %c48 = arith.constant 48 : index
    %c0_13 = arith.constant 0 : index
    %33 = vector.load %arg1[%c48, %c0_13] : memref<368x128xf32, #tpu.memory_space<vmem>>, vector<32x32xf32>
    %cst_14 = arith.constant dense<0.000000e+00> : vector<16x32xf32>
    %34 = tpu.matmul %32, %33, %cst_14 {dimension_numbers = #tpu.dot_dimension_numbers<[1], [0], [0], [1], [0, 0, 1, 1], [], []>} : vector<16x32xf32>, vector<32x32xf32>, vector<16x32xf32> -> vector<16x32xf32>
    %c354 = arith.constant 354 : index
    %c0_15 = arith.constant 0 : index
    %35 = vector.load %arg1[%c354, %c0_15] : memref<368x128xf32, #tpu.memory_space<vmem>>, vector<1x32xf32>
    %36 = vector.broadcast %35 : vector<1x32xf32> to vector<16x32xf32>
    %37 = arith.addf %34, %36 : vector<16x32xf32>
    %38 = arith.addf %12, %37 : vector<16x32xf32>
    %c355 = arith.constant 355 : index
    %c0_16 = arith.constant 0 : index
    %39 = vector.load %arg1[%c355, %c0_16] : memref<368x128xf32, #tpu.memory_space<vmem>>, vector<1x32xf32>
    %c356 = arith.constant 356 : index
    %c0_17 = arith.constant 0 : index
    %40 = vector.load %arg1[%c356, %c0_17] : memref<368x128xf32, #tpu.memory_space<vmem>>, vector<1x32xf32>
    %cst_18 = arith.constant dense<0.000000e+00> : vector<16xf32>
    %41 = vector.multi_reduction <add>, %38, %cst_18 [1] : vector<16x32xf32> to vector<16xf32>
    %42 = vector.shape_cast %41 : vector<16xf32> to vector<16x1xf32>
    %cst_19 = arith.constant 3.200000e+01 : f32
    %43 = vector.broadcast %cst_19 : f32 to vector<16x1xf32>
    %44 = arith.divf %42, %43 : vector<16x1xf32>
    %45 = vector.broadcast %44 : vector<16x1xf32> to vector<16x32xf32>
    %46 = arith.subf %38, %45 : vector<16x32xf32>
    %47 = arith.mulf %46, %46 : vector<16x32xf32>
    %cst_20 = arith.constant dense<0.000000e+00> : vector<16xf32>
    %48 = vector.multi_reduction <add>, %47, %cst_20 [1] : vector<16x32xf32> to vector<16xf32>
    %49 = vector.shape_cast %48 : vector<16xf32> to vector<16x1xf32>
    %cst_21 = arith.constant 3.200000e+01 : f32
    %50 = vector.broadcast %cst_21 : f32 to vector<16x1xf32>
    %51 = arith.divf %49, %50 : vector<16x1xf32>
    %52 = vector.broadcast %44 : vector<16x1xf32> to vector<16x32xf32>
    %53 = arith.subf %38, %52 : vector<16x32xf32>
    %cst_22 = arith.constant 9.99999974E-6 : f32
    %54 = vector.broadcast %cst_22 : f32 to vector<16x1xf32>
    %55 = arith.addf %51, %54 : vector<16x1xf32>
    %56 = math.rsqrt %55 : vector<16x1xf32>
    %57 = vector.broadcast %56 : vector<16x1xf32> to vector<16x32xf32>
    %58 = arith.mulf %53, %57 : vector<16x32xf32>
    %59 = vector.broadcast %39 : vector<1x32xf32> to vector<16x32xf32>
    %60 = arith.mulf %58, %59 : vector<16x32xf32>
    %61 = vector.broadcast %40 : vector<1x32xf32> to vector<16x32xf32>
    %62 = arith.addf %60, %61 : vector<16x32xf32>
    %c80 = arith.constant 80 : index
    %c0_23 = arith.constant 0 : index
    %63 = vector.load %arg1[%c80, %c0_23] : memref<368x128xf32, #tpu.memory_space<vmem>>, vector<32x64xf32>
    %cst_24 = arith.constant dense<0.000000e+00> : vector<16x64xf32>
    %64 = tpu.matmul %62, %63, %cst_24 {dimension_numbers = #tpu.dot_dimension_numbers<[1], [0], [0], [1], [0, 0, 1, 1], [], []>} : vector<16x32xf32>, vector<32x64xf32>, vector<16x64xf32> -> vector<16x64xf32>
    %c357 = arith.constant 357 : index
    %c0_25 = arith.constant 0 : index
    %65 = vector.load %arg1[%c357, %c0_25] : memref<368x128xf32, #tpu.memory_space<vmem>>, vector<1x64xf32>
    %66 = vector.broadcast %65 : vector<1x64xf32> to vector<16x64xf32>
    %67 = arith.addf %64, %66 : vector<16x64xf32>
    %cst_26 = arith.constant 0.000000e+00 : f32
    %68 = vector.broadcast %cst_26 : f32 to vector<16x64xf32>
    %69 = arith.maximumf %67, %68 : vector<16x64xf32>
    %c112 = arith.constant 112 : index
    %c0_27 = arith.constant 0 : index
    %70 = vector.load %arg1[%c112, %c0_27] : memref<368x128xf32, #tpu.memory_space<vmem>>, vector<64x32xf32>
    %cst_28 = arith.constant dense<0.000000e+00> : vector<16x32xf32>
    %71 = tpu.matmul %69, %70, %cst_28 {dimension_numbers = #tpu.dot_dimension_numbers<[1], [0], [0], [1], [0, 0, 1, 1], [], []>} : vector<16x64xf32>, vector<64x32xf32>, vector<16x32xf32> -> vector<16x32xf32>
    %c358 = arith.constant 358 : index
    %c0_29 = arith.constant 0 : index
    %72 = vector.load %arg1[%c358, %c0_29] : memref<368x128xf32, #tpu.memory_space<vmem>>, vector<1x32xf32>
    %73 = vector.broadcast %72 : vector<1x32xf32> to vector<16x32xf32>
    %74 = arith.addf %71, %73 : vector<16x32xf32>
    %75 = arith.addf %62, %74 : vector<16x32xf32>
    %c359 = arith.constant 359 : index
    %c0_30 = arith.constant 0 : index
    %76 = vector.load %arg1[%c359, %c0_30] : memref<368x128xf32, #tpu.memory_space<vmem>>, vector<1x32xf32>
    %c360 = arith.constant 360 : index
    %c0_31 = arith.constant 0 : index
    %77 = vector.load %arg1[%c360, %c0_31] : memref<368x128xf32, #tpu.memory_space<vmem>>, vector<1x32xf32>
    %cst_32 = arith.constant dense<0.000000e+00> : vector<16xf32>
    %78 = vector.multi_reduction <add>, %75, %cst_32 [1] : vector<16x32xf32> to vector<16xf32>
    %79 = vector.shape_cast %78 : vector<16xf32> to vector<16x1xf32>
    %cst_33 = arith.constant 3.200000e+01 : f32
    %80 = vector.broadcast %cst_33 : f32 to vector<16x1xf32>
    %81 = arith.divf %79, %80 : vector<16x1xf32>
    %82 = vector.broadcast %81 : vector<16x1xf32> to vector<16x32xf32>
    %83 = arith.subf %75, %82 : vector<16x32xf32>
    %84 = arith.mulf %83, %83 : vector<16x32xf32>
    %cst_34 = arith.constant dense<0.000000e+00> : vector<16xf32>
    %85 = vector.multi_reduction <add>, %84, %cst_34 [1] : vector<16x32xf32> to vector<16xf32>
    %86 = vector.shape_cast %85 : vector<16xf32> to vector<16x1xf32>
    %cst_35 = arith.constant 3.200000e+01 : f32
    %87 = vector.broadcast %cst_35 : f32 to vector<16x1xf32>
    %88 = arith.divf %86, %87 : vector<16x1xf32>
    %89 = vector.broadcast %81 : vector<16x1xf32> to vector<16x32xf32>
    %90 = arith.subf %75, %89 : vector<16x32xf32>
    %cst_36 = arith.constant 9.99999974E-6 : f32
    %91 = vector.broadcast %cst_36 : f32 to vector<16x1xf32>
    %92 = arith.addf %88, %91 : vector<16x1xf32>
    %93 = math.rsqrt %92 : vector<16x1xf32>
    %94 = vector.broadcast %93 : vector<16x1xf32> to vector<16x32xf32>
    %95 = arith.mulf %90, %94 : vector<16x32xf32>
    %96 = vector.broadcast %76 : vector<1x32xf32> to vector<16x32xf32>
    %97 = arith.mulf %95, %96 : vector<16x32xf32>
    %98 = vector.broadcast %77 : vector<1x32xf32> to vector<16x32xf32>
    %99 = arith.addf %97, %98 : vector<16x32xf32>
    %c176 = arith.constant 176 : index
    %c0_37 = arith.constant 0 : index
    %100 = vector.load %arg1[%c176, %c0_37] : memref<368x128xf32, #tpu.memory_space<vmem>>, vector<32x32xf32>
    %cst_38 = arith.constant dense<0.000000e+00> : vector<16x32xf32>
    %101 = tpu.matmul %99, %100, %cst_38 {dimension_numbers = #tpu.dot_dimension_numbers<[1], [0], [0], [1], [0, 0, 1, 1], [], []>} : vector<16x32xf32>, vector<32x32xf32>, vector<16x32xf32> -> vector<16x32xf32>
    %c361 = arith.constant 361 : index
    %c0_39 = arith.constant 0 : index
    %102 = vector.load %arg1[%c361, %c0_39] : memref<368x128xf32, #tpu.memory_space<vmem>>, vector<1x32xf32>
    %103 = vector.broadcast %102 : vector<1x32xf32> to vector<16x32xf32>
    %104 = arith.addf %101, %103 : vector<16x32xf32>
    %cst_40 = arith.constant 0.000000e+00 : f32
    %105 = vector.broadcast %cst_40 : f32 to vector<16x32xf32>
    %106 = arith.maximumf %104, %105 : vector<16x32xf32>
    %c208 = arith.constant 208 : index
    %c0_41 = arith.constant 0 : index
    %107 = vector.load %arg1[%c208, %c0_41] : memref<368x128xf32, #tpu.memory_space<vmem>>, vector<32x32xf32>
    %cst_42 = arith.constant dense<0.000000e+00> : vector<16x32xf32>
    %108 = tpu.matmul %106, %107, %cst_42 {dimension_numbers = #tpu.dot_dimension_numbers<[1], [0], [0], [1], [0, 0, 1, 1], [], []>} : vector<16x32xf32>, vector<32x32xf32>, vector<16x32xf32> -> vector<16x32xf32>
    %c362 = arith.constant 362 : index
    %c0_43 = arith.constant 0 : index
    %109 = vector.load %arg1[%c362, %c0_43] : memref<368x128xf32, #tpu.memory_space<vmem>>, vector<1x32xf32>
    %110 = vector.broadcast %109 : vector<1x32xf32> to vector<16x32xf32>
    %111 = arith.addf %108, %110 : vector<16x32xf32>
    %cst_44 = arith.constant 0.000000e+00 : f32
    %112 = vector.broadcast %cst_44 : f32 to vector<16x32xf32>
    %113 = arith.maximumf %111, %112 : vector<16x32xf32>
    %c240 = arith.constant 240 : index
    %c0_45 = arith.constant 0 : index
    %114 = vector.load %arg1[%c240, %c0_45] : memref<368x128xf32, #tpu.memory_space<vmem>>, vector<32x94xf32>
    %cst_46 = arith.constant dense<0.000000e+00> : vector<16x94xf32>
    %115 = tpu.matmul %113, %114, %cst_46 {dimension_numbers = #tpu.dot_dimension_numbers<[1], [0], [0], [1], [0, 0, 1, 1], [], []>} : vector<16x32xf32>, vector<32x94xf32>, vector<16x94xf32> -> vector<16x94xf32>
    %c363 = arith.constant 363 : index
    %c0_47 = arith.constant 0 : index
    %116 = vector.load %arg1[%c363, %c0_47] : memref<368x128xf32, #tpu.memory_space<vmem>>, vector<1x94xf32>
    %117 = vector.broadcast %116 : vector<1x94xf32> to vector<16x94xf32>
    %118 = arith.addf %115, %117 : vector<16x94xf32>
    %c0_48 = arith.constant 0 : index
    %c0_49 = arith.constant 0 : index
    %119 = vector.load %arg2[%c0_48, %c0_49] : memref<16x94xf32, #tpu.memory_space<vmem>>, vector<16x94xf32>
    tpu.vector_store %arg2[%c0_48, %c0_49], %118 {strides = array<i32>} : memref<16x94xf32, #tpu.memory_space<vmem>>, vector<16x94xf32>,
    return
  }
}

</mosaic_0001>

<llo_original>
// kernel: classifier_forward.1
$region0: #{classifier_forward.1}
  #allocation0 [shape = 'u32[]', space=smem, size = 0x4, offset = 0x4, fixed_abs, tag = 'smem constant byte address 0x4 - core index']
  #allocation1 [shape = 'u32[144,128]{1,0:T(1,128)}', space=vmem, size = 0x12000, scoped, tag = 'internal scratch']
  %s0 = inlined_call_operand.vmem [shape: f32[2,16,8], index: 0, kind: input, shape index: {}]
  %s1 = inlined_call_operand.hbm [shape: f32[368,128], index: 1, kind: input, shape index: {}]
  %s2 = inlined_call_operand.hbm [shape: f32[16,94], index: 2, kind: output, shape index: {}]
  %s3 = sld [smem:[#allocation0]]
  $region22: #{classifier_forward.1} parent=0
    _
  %s5 = ssub.s32 1, %s3
  %s6 = scalar_select 0, %s5, %s3
  $region1: #{classifier_forward.1} parent=0
    #allocation2 [shape = 'u8[188416]{0}', space=vmem, size = 0x2e000, scoped, tag = 'input window, operand 1, single buffered']
    #allocation3 [shape = 's32[1]{0}', space=sflag, size = 0x4, scoped, tag = 'scoped memory for classifier_forward.1']
    #allocation4 [shape = 's32[1]{0}', space=sflag, size = 0x4, scoped, tag = 'scoped memory for classifier_forward.1']
    #allocation5 [shape = 'u8[8192]{0}', space=vmem, size = 0x2000, scoped, tag = 'output window, operand 0, single buffered']
    %7 = vsyncpa [#allocation3], 0
    %8 = vsyncpa [#allocation4], 0
    // Predicated region
    $region2: #{classifier_forward.1} parent=1 // pred_check
      _
    $region3: #{classifier_forward.1} parent=1 // pred_check_branch
      %10 = sbr.rel (0) target = $region5
    $region4: #{classifier_forward.1} parent=1 // pred_region
      _
    $region5: #{classifier_forward.1} parent=1 // pred_fallthru
      _
    // Predicated region
    $region6: #{classifier_forward.1} parent=1 // pred_check
      _
    $region7: #{classifier_forward.1} parent=1 // pred_check_branch
      %12 = sbr.rel (0) target = $region9
    $region8: #{classifier_forward.1} parent=1 // pred_region
      %s14 = ssub.s32 5888, 5888
      %15 = vsyncadd [#allocation3], %s14
      %s16 = sshll.u32 [#allocation2], 4
      %s17 = int_to_ptr.vmem [resolvable:$true] %s16
      %22 = dma.hbm_to_vmem [thread:$0]  %s1, 5888, %s17, [#allocation3], 128, 128, 8
    $region9: #{classifier_forward.1} parent=1 // pred_fallthru
      _
    // Predicated region
    $region10: #{classifier_forward.1} parent=1 // pred_check
      _
    $region11: #{classifier_forward.1} parent=1 // pred_check_branch
      %24 = sbr.rel (0) target = $region13
    $region12: #{classifier_forward.1} parent=1 // pred_region
      %25 = dma.done [#allocation3], 5888
    $region13: #{classifier_forward.1} parent=1 // pred_fallthru
      _
    %v26 = vld [vmem:[%s0] sm:$0xff]
    %v27 = vld [vmem:[%s0 + $0x8] sm:$0xff]
    %v28 = vld [vmem:[%s0 + $0x10] sm:$0xff]
    %v29 = vld [vmem:[%s0 + $0x18] sm:$0xff]
    %30 = vxpose.xlu0.b32.start [1/16] %v26, 128
    %31 = vxpose.xlu0.b32.cont [2/16] %v27, 128
    %32 = vxpose.xlu0.b32.cont [3/16] 0.0, 128
    %33 = vxpose.xlu0.b32.cont [4/16] 0.0, 128
    %34 = vxpose.xlu0.b32.cont [5/16] 0.0, 128
    %35 = vxpose.xlu0.b32.cont [6/16] 0.0, 128
    %36 = vxpose.xlu0.b32.cont [7/16] 0.0, 128
    %37 = vxpose.xlu0.b32.cont [8/16] 0.0, 128
    %38 = vxpose.xlu0.b32.cont [9/16] 0.0, 128
    %39 = vxpose.xlu0.b32.cont [10/16] 0.0, 128
    %40 = vxpose.xlu0.b32.cont [11/16] 0.0, 128
    %41 = vxpose.xlu0.b32.cont [12/16] 0.0, 128
    %42 = vxpose.xlu0.b32.cont [13/16] 0.0, 128
    %43 = vxpose.xlu0.b32.cont [14/16] 0.0, 128
    %44 = vxpose.xlu0.b32.cont [15/16] 0.0, 128
    %45 = vxpose.xlu0.b32.end [16/16] 0.0, 128
    %v46 = vpop.trf.xlu0
    %v47 = vpop.trf.xlu0
    %v48 = vpop.trf.xlu0
    %v49 = vpop.trf.xlu0
    %v50 = vpop.trf.xlu0
    %v51 = vpop.trf.xlu0
    %v52 = vpop.trf.xlu0
    %v53 = vpop.trf.xlu0
    %v54 = vpop.trf.xlu0
    %v55 = vpop.trf.xlu0
    %v56 = vpop.trf.xlu0
    %v57 = vpop.trf.xlu0
    %v58 = vpop.trf.xlu0
    %v59 = vpop.trf.xlu0
    %v60 = vpop.trf.xlu0
    %v61 = vpop.trf.xlu0
    %62 = vxpose.xlu0.b32.start [1/16] %v28, 128
    %63 = vxpose.xlu0.b32.cont [2/16] %v29, 128
    %64 = vxpose.xlu0.b32.cont [3/16] 0.0, 128
    %65 = vxpose.xlu0.b32.cont [4/16] 0.0, 128
    %66 = vxpose.xlu0.b32.cont [5/16] 0.0, 128
    %67 = vxpose.xlu0.b32.cont [6/16] 0.0, 128
    %68 = vxpose.xlu0.b32.cont [7/16] 0.0, 128
    %69 = vxpose.xlu0.b32.cont [8/16] 0.0, 128
    %70 = vxpose.xlu0.b32.cont [9/16] 0.0, 128
    %71 = vxpose.xlu0.b32.cont [10/16] 0.0, 128
    %72 = vxpose.xlu0.b32.cont [11/16] 0.0, 128
    %73 = vxpose.xlu0.b32.cont [12/16] 0.0, 128
    %74 = vxpose.xlu0.b32.cont [13/16] 0.0, 128
    %75 = vxpose.xlu0.b32.cont [14/16] 0.0, 128
    %76 = vxpose.xlu0.b32.cont [15/16] 0.0, 128
    %77 = vxpose.xlu0.b32.end [16/16] 0.0, 128
    %v78 = vpop.trf.xlu0
    %v79 = vpop.trf.xlu0
    %v80 = vpop.trf.xlu0
    %v81 = vpop.trf.xlu0
    %v82 = vpop.trf.xlu0
    %v83 = vpop.trf.xlu0
    %v84 = vpop.trf.xlu0
    %v85 = vpop.trf.xlu0
    %v86 = vpop.trf.xlu0
    %v87 = vpop.trf.xlu0
    %v88 = vpop.trf.xlu0
    %v89 = vpop.trf.xlu0
    %v90 = vpop.trf.xlu0
    %v91 = vpop.trf.xlu0
    %v92 = vpop.trf.xlu0
    %v93 = vpop.trf.xlu0
    %v94 = vld [vmem:[#allocation2] sm:$0xff]
    %v95 = vld [vmem:[#allocation2 + $0x8] sm:$0xff]
    %v96 = vld [vmem:[#allocation2 + $0x160] sm:$0x1]
    %v97 = vlaneseq
    %v98 = vshrl.u32 %v97, 7
    %v99 = vsub.s32 0, %v98
    %v100 = vrot.slane %v96, %v99
    %vm101 = vcmask 130048
    %v103 = vsel %vm101, %v46, 0
    %v106 = vsel %vm101, %v78, 0
    %108 = vmatprep.subr.mxu0 0.0
    %109 = vmatpush1.msra.mxu0 0.0
    %110 = vmatprep.subr.mxu0 0.0
    %111 = vmatpush1.msra.mxu0 0.0
    %112 = vmatprep.subr.mxu0 0.0
    %113 = vmatpush1.msra.mxu0 0.0
    %114 = vmatprep.subr.mxu0 0.0
    %115 = vmatpush1.msra.mxu0 0.0
    %116 = vmatprep.subr.mxu0 0.0
    %117 = vmatpush1.msra.mxu0 0.0
    %118 = vmatprep.subr.mxu0 0.0
    %119 = vmatpush1.msra.mxu0 0.0
    %120 = vmatprep.subr.mxu0 0.0
    %121 = vmatpush1.msra.mxu0 0.0
    %122 = vmatprep.subr.mxu0 0.0
    %123 = vmatpush1.msra.mxu0 0.0
    %124 = vmatprep.subr.mxu0 0.0
    %125 = vmatpush1.msra.mxu0 0.0
    %126 = vmatprep.subr.mxu0 0.0
    %127 = vmatpush1.msra.mxu0 0.0
    %128 = vmatprep.subr.mxu0 0.0
    %129 = vmatpush1.msra.mxu0 0.0
    %130 = vmatprep.subr.mxu0 0.0
    %131 = vmatpush1.msra.mxu0 0.0
    %132 = vmatprep.subr.mxu0 0.0
    %133 = vmatpush1.msra.mxu0 0.0
    %134 = vmatprep.subr.mxu0 0.0
    %135 = vmatpush1.msra.mxu0 0.0
    %136 = vmatprep.subr.mxu0 0.0
    %137 = vmatpush1.msra.mxu0 %v95
    %138 = vmatprep.subr.mxu0 0.0
    %139 = vmatpush1.msra.mxu0 %v94
    %140 = vmatprep.subr.mxu0 0.0
    %141 = vmatpush2.msra.mxu0 0.0
    %142 = vmatprep.subr.mxu0 0.0
    %143 = vmatpush2.msra.mxu0 0.0
    %144 = vmatprep.subr.mxu0 0.0
    %145 = vmatpush2.msra.mxu0 0.0
    %146 = vmatprep.subr.mxu0 0.0
    %147 = vmatpush2.msra.mxu0 0.0
    %148 = vmatprep.subr.mxu0 0.0
    %149 = vmatpush2.msra.mxu0 0.0
    %150 = vmatprep.subr.mxu0 0.0
    %151 = vmatpush2.msra.mxu0 0.0
    %152 = vmatprep.subr.mxu0 0.0
    %153 = vmatpush2.msra.mxu0 0.0
    %154 = vmatprep.subr.mxu0 0.0
    %155 = vmatpush2.msra.mxu0 0.0
    %156 = vmatprep.subr.mxu0 0.0
    %157 = vmatpush2.msra.mxu0 0.0
    %158 = vmatprep.subr.mxu0 0.0
    %159 = vmatpush2.msra.mxu0 0.0
    %160 = vmatprep.subr.mxu0 0.0
    %161 = vmatpush2.msra.mxu0 0.0
    %162 = vmatprep.subr.mxu0 0.0
    %163 = vmatpush2.msra.mxu0 0.0
    %164 = vmatprep.subr.mxu0 0.0
    %165 = vmatpush2.msra.mxu0 0.0
    %166 = vmatprep.subr.mxu0 0.0
    %167 = vmatpush2.msra.mxu0 0.0
    %168 = vmatprep.subr.mxu0 0.0
    %169 = vmatpush2.msra.mxu0 0.0
    %170 = vmatprep.subr.mxu0 0.0
    %171 = vmatpush2.msra.mxu0 0.0
    %172 = vmatprep.mubr.f32.mxu0 0.0
    %173 = vmatmul.mubr.f32.gmra.mxu0 %v103
    %v174 = vpop.f32.mrf.mxu0
    %v175 = vadd.f32 %v100, %v174
    %v176 = vpop.f32.mrf.mxu0
    %177 = vmatprep.mubr.f32.mxu0 0.0
    %178 = vmatmul.mubr.f32.gmra.mxu0 %v106
    %v179 = vpop.f32.mrf.mxu0
    %v180 = vadd.f32 %v100, %v179
    %v181 = vpop.f32.mrf.mxu0
    %182 = vdwg.mxu0
    %v183 = vld [vmem:[#allocation2 + $0x10] sm:$0xff]
    %v184 = vld [vmem:[#allocation2 + $0x18] sm:$0xff]
    %v185 = vld [vmem:[#allocation2 + $0x20] sm:$0xff]
    %v186 = vld [vmem:[#allocation2 + $0x28] sm:$0xff]
    %v187 = vld [vmem:[#allocation2 + $0x161] sm:$0x1]
    %v188 = vlaneseq
    %v189 = vshrl.u32 %v188, 7
    %v190 = vsub.s32 0, %v189
    %v191 = vrot.slane %v187, %v190
    %vm192 = vcmask 261120
    %v194 = vsel %vm192, %v175, 0
    %v197 = vsel %vm192, %v180, 0
    %199 = vmatprep.subr.mxu0 0.0
    %200 = vmatpush1.msra.mxu0 0.0
    %201 = vmatprep.subr.mxu0 0.0
    %202 = vmatpush1.msra.mxu0 0.0
    %203 = vmatprep.subr.mxu0 0.0
    %204 = vmatpush1.msra.mxu0 0.0
    %205 = vmatprep.subr.mxu0 0.0
    %206 = vmatpush1.msra.mxu0 0.0
    %207 = vmatprep.subr.mxu0 0.0
    %208 = vmatpush1.msra.mxu0 0.0
    %209 = vmatprep.subr.mxu0 0.0
    %210 = vmatpush1.msra.mxu0 0.0
    %211 = vmatprep.subr.mxu0 0.0
    %212 = vmatpush1.msra.mxu0 0.0
    %213 = vmatprep.subr.mxu0 0.0
    %214 = vmatpush1.msra.mxu0 0.0
    %215 = vmatprep.subr.mxu0 0.0
    %216 = vmatpush1.msra.mxu0 0.0
    %217 = vmatprep.subr.mxu0 0.0
    %218 = vmatpush1.msra.mxu0 0.0
    %219 = vmatprep.subr.mxu0 0.0
    %220 = vmatpush1.msra.mxu0 0.0
    %221 = vmatprep.subr.mxu0 0.0
    %222 = vmatpush1.msra.mxu0 0.0
    %223 = vmatprep.subr.mxu0 0.0
    %224 = vmatpush1.msra.mxu0 %v186
    %225 = vmatprep.subr.mxu0 0.0
    %226 = vmatpush1.msra.mxu0 %v185
    %227 = vmatprep.subr.mxu0 0.0
    %228 = vmatpush1.msra.mxu0 %v184
    %229 = vmatprep.subr.mxu0 0.0
    %230 = vmatpush1.msra.mxu0 %v183
    %231 = vmatprep.subr.mxu0 0.0
    %232 = vmatpush2.msra.mxu0 0.0
    %233 = vmatprep.subr.mxu0 0.0
    %234 = vmatpush2.msra.mxu0 0.0
    %235 = vmatprep.subr.mxu0 0.0
    %236 = vmatpush2.msra.mxu0 0.0
    %237 = vmatprep.subr.mxu0 0.0
    %238 = vmatpush2.msra.mxu0 0.0
    %239 = vmatprep.subr.mxu0 0.0
    %240 = vmatpush2.msra.mxu0 0.0
    %241 = vmatprep.subr.mxu0 0.0
    %242 = vmatpush2.msra.mxu0 0.0
    %243 = vmatprep.subr.mxu0 0.0
    %244 = vmatpush2.msra.mxu0 0.0
    %245 = vmatprep.subr.mxu0 0.0
    %246 = vmatpush2.msra.mxu0 0.0
    %247 = vmatprep.subr.mxu0 0.0
    %248 = vmatpush2.msra.mxu0 0.0
    %249 = vmatprep.subr.mxu0 0.0
    %250 = vmatpush2.msra.mxu0 0.0
    %251 = vmatprep.subr.mxu0 0.0
    %252 = vmatpush2.msra.mxu0 0.0
    %253 = vmatprep.subr.mxu0 0.0
    %254 = vmatpush2.msra.mxu0 0.0
    %255 = vmatprep.subr.mxu0 0.0
    %256 = vmatpush2.msra.mxu0 0.0
    %257 = vmatprep.subr.mxu0 0.0
    %258 = vmatpush2.msra.mxu0 0.0
    %259 = vmatprep.subr.mxu0 0.0
    %260 = vmatpush2.msra.mxu0 0.0
    %261 = vmatprep.subr.mxu0 0.0
    %262 = vmatpush2.msra.mxu0 0.0
    %263 = vmatprep.mubr.f32.mxu0 0.0
    %264 = vmatmul.mubr.f32.gmra.mxu0 %v194
    %v265 = vpop.f32.mrf.mxu0
    %v266 = vadd.f32 %v191, %v265
    %v267 = vpop.f32.mrf.mxu0
    %268 = vmatprep.mubr.f32.mxu0 0.0
    %269 = vmatmul.mubr.f32.gmra.mxu0 %v197
    %v270 = vpop.f32.mrf.mxu0
    %v271 = vadd.f32 %v191, %v270
    %v272 = vpop.f32.mrf.mxu0
    %273 = vdwg.mxu0
    %v274 = vld [vmem:[#allocation2 + $0x110] sm:$0xff]
    %v275 = vld [vmem:[#allocation2 + $0x118] sm:$0xff]
    %v276 = vld [vmem:[#allocation2 + $0x120] sm:$0xff]
    %v277 = vld [vmem:[#allocation2 + $0x128] sm:$0xff]
    %v278 = vld [vmem:[#allocation2 + $0x130] sm:$0xff]
    %v279 = vld [vmem:[#allocation2 + $0x138] sm:$0xff]
    %v280 = vld [vmem:[#allocation2 + $0x140] sm:$0xff]
    %v281 = vld [vmem:[#allocation2 + $0x148] sm:$0xff]
    %v282 = vld [vmem:[#allocation2 + $0x150] sm:$0xff]
    %v283 = vld [vmem:[#allocation2 + $0x158] sm:$0xff]
    %292 = vrot.lane.b32.xlu0 %v274, 32
    %v293 = vpop.permute.xlu0 %292
    %294 = vrot.lane.b32.xlu0 %v275, 32
    %v295 = vpop.permute.xlu0 %294
    %296 = vrot.lane.b32.xlu0 %v276, 32
    %v297 = vpop.permute.xlu0 %296
    %298 = vrot.lane.b32.xlu0 %v277, 32
    %v299 = vpop.permute.xlu0 %298
    %300 = vrot.lane.b32.xlu0 %v278, 32
    %v301 = vpop.permute.xlu0 %300
    %302 = vrot.lane.b32.xlu0 %v279, 32
    %v303 = vpop.permute.xlu0 %302
    %304 = vrot.lane.b32.xlu0 %v280, 32
    %v305 = vpop.permute.xlu0 %304
    %306 = vrot.lane.b32.xlu0 %v281, 32
    %v307 = vpop.permute.xlu0 %306
    %v316 = vmul.f32 %v266, %v293
    %v317 = vmul.f32 %v271, %v295
    %v318 = vmul.f32 %v266, %v297
    %v319 = vmul.f32 %v271, %v299
    %v320 = vmul.f32 %v266, %v301
    %v321 = vmul.f32 %v271, %v303
    %v322 = vmul.f32 %v266, %v305
    %v323 = vmul.f32 %v271, %v307
    %324 = vrot.lane.b32.xlu0 %v274, 64
    %v325 = vpop.permute.xlu0 %324
    %326 = vrot.lane.b32.xlu0 %v275, 64
    %v327 = vpop.permute.xlu0 %326
    %328 = vrot.lane.b32.xlu0 %v276, 64
    %v329 = vpop.permute.xlu0 %328
    %330 = vrot.lane.b32.xlu0 %v277, 64
    %v331 = vpop.permute.xlu0 %330
    %332 = vrot.lane.b32.xlu0 %v278, 64
    %v333 = vpop.permute.xlu0 %332
    %334 = vrot.lane.b32.xlu0 %v279, 64
    %v335 = vpop.permute.xlu0 %334
    %336 = vrot.lane.b32.xlu0 %v280, 64
    %v337 = vpop.permute.xlu0 %336
    %338 = vrot.lane.b32.xlu0 %v281, 64
    %v339 = vpop.permute.xlu0 %338
    %v348 = vmul.f32 %v266, %v325
    %v349 = vmul.f32 %v271, %v327
    %v350 = vmul.f32 %v266, %v329
    %v351 = vmul.f32 %v271, %v331
    %v352 = vmul.f32 %v266, %v333
    %v353 = vmul.f32 %v271, %v335
    %v354 = vmul.f32 %v266, %v337
    %v355 = vmul.f32 %v271, %v339
    %364 = vrot.lane.b32.xlu0 %v316, 96
    %v365 = vpop.permute.xlu0 %364
    %366 = vrot.lane.b32.xlu0 %v317, 96
    %v367 = vpop.permute.xlu0 %366
    %368 = vrot.lane.b32.xlu0 %v318, 96
    %v369 = vpop.permute.xlu0 %368
    %370 = vrot.lane.b32.xlu0 %v319, 96
    %v371 = vpop.permute.xlu0 %370
    %372 = vrot.lane.b32.xlu0 %v320, 96
    %v373 = vpop.permute.xlu0 %372
    %374 = vrot.lane.b32.xlu0 %v321, 96
    %v375 = vpop.permute.xlu0 %374
    %376 = vrot.lane.b32.xlu0 %v322, 96
    %v377 = vpop.permute.xlu0 %376
    %378 = vrot.lane.b32.xlu0 %v323, 96
    %v379 = vpop.permute.xlu0 %378
    %v381 = vsel %vm192, %v266, 0
    %v384 = vsel %vm192, %v271, 0
    %v386 = vsel %vm192, %v365, 0
    %v388 = vsel %vm192, %v367, 0
    %v390 = vsel %vm192, %v369, 0
    %v392 = vsel %vm192, %v371, 0
    %v394 = vsel %vm192, %v373, 0
    %v396 = vsel %vm192, %v375, 0
    %v398 = vsel %vm192, %v377, 0
    %v400 = vsel %vm192, %v379, 0
    %402 = vmatprep.subr.mxu0 0.0
    %403 = vmatpush1.xpose.msra.mxu0 0.0
    %404 = vmatprep.subr.mxu0 0.0
    %405 = vmatpush1.xpose.msra.mxu0 0.0
    %406 = vmatprep.subr.mxu0 0.0
    %407 = vmatpush1.xpose.msra.mxu0 0.0
    %408 = vmatprep.subr.mxu0 0.0
    %409 = vmatpush1.xpose.msra.mxu0 0.0
    %410 = vmatprep.subr.mxu0 0.0
    %411 = vmatpush1.xpose.msra.mxu0 0.0
    %412 = vmatprep.subr.mxu0 0.0
    %413 = vmatpush1.xpose.msra.mxu0 0.0
    %414 = vmatprep.subr.mxu0 0.0
    %415 = vmatpush1.xpose.msra.mxu0 0.0
    %416 = vmatprep.subr.mxu0 0.0
    %417 = vmatpush1.xpose.msra.mxu0 0.0
    %418 = vmatprep.subr.mxu0 0.0
    %419 = vmatpush1.xpose.msra.mxu0 %v400
    %420 = vmatprep.subr.mxu0 0.0
    %421 = vmatpush1.xpose.msra.mxu0 %v398
    %422 = vmatprep.subr.mxu0 0.0
    %423 = vmatpush1.xpose.msra.mxu0 %v396
    %424 = vmatprep.subr.mxu0 0.0
    %425 = vmatpush1.xpose.msra.mxu0 %v394
    %426 = vmatprep.subr.mxu0 0.0
    %427 = vmatpush1.xpose.msra.mxu0 %v392
    %428 = vmatprep.subr.mxu0 0.0
    %429 = vmatpush1.xpose.msra.mxu0 %v390
    %430 = vmatprep.subr.mxu0 0.0
    %431 = vmatpush1.xpose.msra.mxu0 %v388
    %432 = vmatprep.subr.mxu0 0.0
    %433 = vmatpush1.xpose.msra.mxu0 %v386
    %434 = vmatprep.subr.mxu0 0.0
    %435 = vmatpush2.xpose.msra.mxu0 0.0
    %436 = vmatprep.subr.mxu0 0.0
    %437 = vmatpush2.xpose.msra.mxu0 0.0
    %438 = vmatprep.subr.mxu0 0.0
    %439 = vmatpush2.xpose.msra.mxu0 0.0
    %440 = vmatprep.subr.mxu0 0.0
    %441 = vmatpush2.xpose.msra.mxu0 0.0
    %442 = vmatprep.subr.mxu0 0.0
    %443 = vmatpush2.xpose.msra.mxu0 0.0
    %444 = vmatprep.subr.mxu0 0.0
    %445 = vmatpush2.xpose.msra.mxu0 0.0
    %446 = vmatprep.subr.mxu0 0.0
    %447 = vmatpush2.xpose.msra.mxu0 0.0
    %448 = vmatprep.subr.mxu0 0.0
    %449 = vmatpush2.xpose.msra.mxu0 0.0
    %450 = vmatprep.subr.mxu0 0.0
    %451 = vmatpush2.xpose.msra.mxu0 0.0
    %452 = vmatprep.subr.mxu0 0.0
    %453 = vmatpush2.xpose.msra.mxu0 0.0
    %454 = vmatprep.subr.mxu0 0.0
    %455 = vmatpush2.xpose.msra.mxu0 0.0
    %456 = vmatprep.subr.mxu0 0.0
    %457 = vmatpush2.xpose.msra.mxu0 0.0
    %458 = vmatprep.subr.mxu0 0.0
    %459 = vmatpush2.xpose.msra.mxu0 0.0
    %460 = vmatprep.subr.mxu0 0.0
    %461 = vmatpush2.xpose.msra.mxu0 0.0
    %462 = vmatprep.subr.mxu0 0.0
    %463 = vmatpush2.xpose.msra.mxu0 0.0
    %464 = vmatprep.subr.mxu0 0.0
    %465 = vmatpush2.xpose.msra.mxu0 0.0
    %466 = vmatprep.mubr.f32.mxu0 0.0
    %467 = vmatmul.mubr.f32.gmra.mxu0 %v381
    %v468 = vpop.f32.mrf.mxu0
    %v469 = vadd.f32 0.0, %v468
    %v470 = vpop.f32.mrf.mxu0
    %471 = vmatprep.mubr.f32.mxu0 0.0
    %472 = vmatmul.mubr.f32.gmra.mxu0 %v384
    %v473 = vpop.f32.mrf.mxu0
    %v474 = vadd.f32 0.0, %v473
    %v475 = vpop.f32.mrf.mxu0
    %476 = vdwg.mxu0
    %v477 = vmul.f32 %v469, 1.442695
    %v478 = vpow.pop %v477
    %v479 = vmul.f32 %v474, 1.442695
    %v480 = vpow.pop %v479
    %v481 = vmul.f32 %v478, %v282
    %v482 = vmul.f32 %v480, %v283
    %vm483 = vcmask 523264
    %v485 = vsel %vm483, %v481, 0
    %v488 = vsel %vm483, %v482, 0
    %490 = vmatprep.subr.mxu0 0.0
    %491 = vmatpush1.msra.mxu0 0.0
    %492 = vmatprep.subr.mxu0 0.0
    %493 = vmatpush1.msra.mxu0 0.0
    %494 = vmatprep.subr.mxu0 0.0
    %495 = vmatpush1.msra.mxu0 0.0
    %496 = vmatprep.subr.mxu0 0.0
    %497 = vmatpush1.msra.mxu0 0.0
    %498 = vmatprep.subr.mxu0 0.0
    %499 = vmatpush1.msra.mxu0 0.0
    %500 = vmatprep.subr.mxu0 0.0
    %501 = vmatpush1.msra.mxu0 0.0
    %502 = vmatprep.subr.mxu0 0.0
    %503 = vmatpush1.msra.mxu0 0.0
    %504 = vmatprep.subr.mxu0 0.0
    %505 = vmatpush1.msra.mxu0 0.0
    %506 = vmatprep.subr.mxu0 0.0
    %507 = vmatpush1.msra.mxu0 %v281
    %508 = vmatprep.subr.mxu0 0.0
    %509 = vmatpush1.msra.mxu0 %v280
    %510 = vmatprep.subr.mxu0 0.0
    %511 = vmatpush1.msra.mxu0 %v279
    %512 = vmatprep.subr.mxu0 0.0
    %513 = vmatpush1.msra.mxu0 %v278
    %514 = vmatprep.subr.mxu0 0.0
    %515 = vmatpush1.msra.mxu0 %v277
    %516 = vmatprep.subr.mxu0 0.0
    %517 = vmatpush1.msra.mxu0 %v276
    %518 = vmatprep.subr.mxu0 0.0
    %519 = vmatpush1.msra.mxu0 %v275
    %520 = vmatprep.subr.mxu0 0.0
    %521 = vmatpush1.msra.mxu0 %v274
    %522 = vmatprep.subr.mxu0 0.0
    %523 = vmatpush2.msra.mxu0 0.0
    %524 = vmatprep.subr.mxu0 0.0
    %525 = vmatpush2.msra.mxu0 0.0
    %526 = vmatprep.subr.mxu0 0.0
    %527 = vmatpush2.msra.mxu0 0.0
    %528 = vmatprep.subr.mxu0 0.0
    %529 = vmatpush2.msra.mxu0 0.0
    %530 = vmatprep.subr.mxu0 0.0
    %531 = vmatpush2.msra.mxu0 0.0
    %532 = vmatprep.subr.mxu0 0.0
    %533 = vmatpush2.msra.mxu0 0.0
    %534 = vmatprep.subr.mxu0 0.0
    %535 = vmatpush2.msra.mxu0 0.0
    %536 = vmatprep.subr.mxu0 0.0
    %537 = vmatpush2.msra.mxu0 0.0
    %538 = vmatprep.subr.mxu0 0.0
    %539 = vmatpush2.msra.mxu0 0.0
    %540 = vmatprep.subr.mxu0 0.0
    %541 = vmatpush2.msra.mxu0 0.0
    %542 = vmatprep.subr.mxu0 0.0
    %543 = vmatpush2.msra.mxu0 0.0
    %544 = vmatprep.subr.mxu0 0.0
    %545 = vmatpush2.msra.mxu0 0.0
    %546 = vmatprep.subr.mxu0 0.0
    %547 = vmatpush2.msra.mxu0 0.0
    %548 = vmatprep.subr.mxu0 0.0
    %549 = vmatpush2.msra.mxu0 0.0
    %550 = vmatprep.subr.mxu0 0.0
    %551 = vmatpush2.msra.mxu0 0.0
    %552 = vmatprep.subr.mxu0 0.0
    %553 = vmatpush2.msra.mxu0 0.0
    %554 = vmatprep.mubr.f32.mxu0 0.0
    %555 = vmatmul.mubr.f32.gmra.mxu0 %v485
    %v556 = vpop.f32.mrf.mxu0
    %v557 = vadd.f32 0.0, %v556
    %v558 = vpop.f32.mrf.mxu0
    %559 = vmatprep.mubr.f32.mxu0 0.0
    %560 = vmatmul.mubr.f32.gmra.mxu0 %v488
    %v561 = vpop.f32.mrf.mxu0
    %v562 = vadd.f32 0.0, %v561
    %v563 = vpop.f32.mrf.mxu0
    %564 = vdwg.mxu0
    %573 = vrot.lane.b32.xlu0 %v348, 64
    %v574 = vpop.permute.xlu0 %573
    %575 = vrot.lane.b32.xlu0 %v349, 64
    %v576 = vpop.permute.xlu0 %575
    %577 = vrot.lane.b32.xlu0 %v350, 64
    %v578 = vpop.permute.xlu0 %577
    %579 = vrot.lane.b32.xlu0 %v351, 64
    %v580 = vpop.permute.xlu0 %579
    %581 = vrot.lane.b32.xlu0 %v352, 64
    %v582 = vpop.permute.xlu0 %581
    %583 = vrot.lane.b32.xlu0 %v353, 64
    %v584 = vpop.permute.xlu0 %583
    %585 = vrot.lane.b32.xlu0 %v354, 64
    %v586 = vpop.permute.xlu0 %585
    %587 = vrot.lane.b32.xlu0 %v355, 64
    %v588 = vpop.permute.xlu0 %587
    %597 = vmatprep.subr.mxu0 0.0
    %598 = vmatpush1.msra.mxu0 0.0
    %599 = vmatprep.subr.mxu0 0.0
    %600 = vmatpush1.msra.mxu0 0.0
    %601 = vmatprep.subr.mxu0 0.0
    %602 = vmatpush1.msra.mxu0 0.0
    %603 = vmatprep.subr.mxu0 0.0
    %604 = vmatpush1.msra.mxu0 0.0
    %605 = vmatprep.subr.mxu0 0.0
    %606 = vmatpush1.msra.mxu0 0.0
    %607 = vmatprep.subr.mxu0 0.0
    %608 = vmatpush1.msra.mxu0 0.0
    %609 = vmatprep.subr.mxu0 0.0
    %610 = vmatpush1.msra.mxu0 0.0
    %611 = vmatprep.subr.mxu0 0.0
    %612 = vmatpush1.msra.mxu0 0.0
    %613 = vmatprep.subr.mxu0 0.0
    %614 = vmatpush1.msra.mxu0 %v588
    %615 = vmatprep.subr.mxu0 0.0
    %616 = vmatpush1.msra.mxu0 %v586
    %617 = vmatprep.subr.mxu0 0.0
    %618 = vmatpush1.msra.mxu0 %v584
    %619 = vmatprep.subr.mxu0 0.0
    %620 = vmatpush1.msra.mxu0 %v582
    %621 = vmatprep.subr.mxu0 0.0
    %622 = vmatpush1.msra.mxu0 %v580
    %623 = vmatprep.subr.mxu0 0.0
    %624 = vmatpush1.msra.mxu0 %v578
    %625 = vmatprep.subr.mxu0 0.0
    %626 = vmatpush1.msra.mxu0 %v576
    %627 = vmatprep.subr.mxu0 0.0
    %628 = vmatpush1.msra.mxu0 %v574
    %629 = vmatprep.subr.mxu0 0.0
    %630 = vmatpush2.msra.mxu0 0.0
    %631 = vmatprep.subr.mxu0 0.0
    %632 = vmatpush2.msra.mxu0 0.0
    %633 = vmatprep.subr.mxu0 0.0
    %634 = vmatpush2.msra.mxu0 0.0
    %635 = vmatprep.subr.mxu0 0.0
    %636 = vmatpush2.msra.mxu0 0.0
    %637 = vmatprep.subr.mxu0 0.0
    %638 = vmatpush2.msra.mxu0 0.0
    %639 = vmatprep.subr.mxu0 0.0
    %640 = vmatpush2.msra.mxu0 0.0
    %641 = vmatprep.subr.mxu0 0.0
    %642 = vmatpush2.msra.mxu0 0.0
    %643 = vmatprep.subr.mxu0 0.0
    %644 = vmatpush2.msra.mxu0 0.0
    %645 = vmatprep.subr.mxu0 0.0
    %646 = vmatpush2.msra.mxu0 0.0
    %647 = vmatprep.subr.mxu0 0.0
    %648 = vmatpush2.msra.mxu0 0.0
    %649 = vmatprep.subr.mxu0 0.0
    %650 = vmatpush2.msra.mxu0 0.0
    %651 = vmatprep.subr.mxu0 0.0
    %652 = vmatpush2.msra.mxu0 0.0
    %653 = vmatprep.subr.mxu0 0.0
    %654 = vmatpush2.msra.mxu0 0.0
    %655 = vmatprep.subr.mxu0 0.0
    %656 = vmatpush2.msra.mxu0 0.0
    %657 = vmatprep.subr.mxu0 0.0
    %658 = vmatpush2.msra.mxu0 0.0
    %659 = vmatprep.subr.mxu0 0.0
    %660 = vmatpush2.msra.mxu0 0.0
    %661 = vmatprep.mubr.f32.mxu0 0.0
    %662 = vmatmul.mubr.f32.gmra.mxu0 %v485
    %v663 = vpop.f32.mrf.mxu0
    %v664 = vadd.f32 0.0, %v663
    %v665 = vpop.f32.mrf.mxu0
    %666 = vmatprep.mubr.f32.mxu0 0.0
    %667 = vmatmul.mubr.f32.gmra.mxu0 %v488
    %v668 = vpop.f32.mrf.mxu0
    %v669 = vadd.f32 0.0, %v668
    %v670 = vpop.f32.mrf.mxu0
    %671 = vdwg.mxu0
    %v672 = vrcp.pop %v557
    %v673 = vmul.f32 %v664, %v672
    %v674 = vrcp.pop %v562
    %v675 = vmul.f32 %v669, %v674
    %v676 = vld [vmem:[#allocation2 + $0x30] sm:$0xff]
    %v677 = vld [vmem:[#allocation2 + $0x38] sm:$0xff]
    %v678 = vld [vmem:[#allocation2 + $0x40] sm:$0xff]
    %v679 = vld [vmem:[#allocation2 + $0x48] sm:$0xff]
    %v680 = vld [vmem:[#allocation2 + $0x162] sm:$0x1]
    %v681 = vlaneseq
    %v682 = vshrl.u32 %v681, 7
    %v683 = vsub.s32 0, %v682
    %v684 = vrot.slane %v680, %v683
    %v686 = vsel %vm192, %v673, 0
    %v689 = vsel %vm192, %v675, 0
    %691 = vmatprep.subr.mxu0 0.0
    %692 = vmatpush1.msra.mxu0 0.0
    %693 = vmatprep.subr.mxu0 0.0
    %694 = vmatpush1.msra.mxu0 0.0
    %695 = vmatprep.subr.mxu0 0.0
    %696 = vmatpush1.msra.mxu0 0.0
    %697 = vmatprep.subr.mxu0 0.0
    %698 = vmatpush1.msra.mxu0 0.0
    %699 = vmatprep.subr.mxu0 0.0
    %700 = vmatpush1.msra.mxu0 0.0
    %701 = vmatprep.subr.mxu0 0.0
    %702 = vmatpush1.msra.mxu0 0.0
    %703 = vmatprep.subr.mxu0 0.0
    %704 = vmatpush1.msra.mxu0 0.0
    %705 = vmatprep.subr.mxu0 0.0
    %706 = vmatpush1.msra.mxu0 0.0
    %707 = vmatprep.subr.mxu0 0.0
    %708 = vmatpush1.msra.mxu0 0.0
    %709 = vmatprep.subr.mxu0 0.0
    %710 = vmatpush1.msra.mxu0 0.0
    %711 = vmatprep.subr.mxu0 0.0
    %712 = vmatpush1.msra.mxu0 0.0
    %713 = vmatprep.subr.mxu0 0.0
    %714 = vmatpush1.msra.mxu0 0.0
    %715 = vmatprep.subr.mxu0 0.0
    %716 = vmatpush1.msra.mxu0 %v679
    %717 = vmatprep.subr.mxu0 0.0
    %718 = vmatpush1.msra.mxu0 %v678
    %719 = vmatprep.subr.mxu0 0.0
    %720 = vmatpush1.msra.mxu0 %v677
    %721 = vmatprep.subr.mxu0 0.0
    %722 = vmatpush1.msra.mxu0 %v676
    %723 = vmatprep.subr.mxu0 0.0
    %724 = vmatpush2.msra.mxu0 0.0
    %725 = vmatprep.subr.mxu0 0.0
    %726 = vmatpush2.msra.mxu0 0.0
    %727 = vmatprep.subr.mxu0 0.0
    %728 = vmatpush2.msra.mxu0 0.0
    %729 = vmatprep.subr.mxu0 0.0
    %730 = vmatpush2.msra.mxu0 0.0
    %731 = vmatprep.subr.mxu0 0.0
    %732 = vmatpush2.msra.mxu0 0.0
    %733 = vmatprep.subr.mxu0 0.0
    %734 = vmatpush2.msra.mxu0 0.0
    %735 = vmatprep.subr.mxu0 0.0
    %736 = vmatpush2.msra.mxu0 0.0
    %737 = vmatprep.subr.mxu0 0.0
    %738 = vmatpush2.msra.mxu0 0.0
    %739 = vmatprep.subr.mxu0 0.0
    %740 = vmatpush2.msra.mxu0 0.0
    %741 = vmatprep.subr.mxu0 0.0
    %742 = vmatpush2.msra.mxu0 0.0
    %743 = vmatprep.subr.mxu0 0.0
    %744 = vmatpush2.msra.mxu0 0.0
    %745 = vmatprep.subr.mxu0 0.0
    %746 = vmatpush2.msra.mxu0 0.0
    %747 = vmatprep.subr.mxu0 0.0
    %748 = vmatpush2.msra.mxu0 0.0
    %749 = vmatprep.subr.mxu0 0.0
    %750 = vmatpush2.msra.mxu0 0.0
    %751 = vmatprep.subr.mxu0 0.0
    %752 = vmatpush2.msra.mxu0 0.0
    %753 = vmatprep.subr.mxu0 0.0
    %754 = vmatpush2.msra.mxu0 0.0
    %755 = vmatprep.mubr.f32.mxu0 0.0
    %756 = vmatmul.mubr.f32.gmra.mxu0 %v686
    %v757 = vpop.f32.mrf.mxu0
    %v758 = vadd.f32 %v684, %v757
    %v759 = vpop.f32.mrf.mxu0
    %760 = vmatprep.mubr.f32.mxu0 0.0
    %761 = vmatmul.mubr.f32.gmra.mxu0 %v689
    %v762 = vpop.f32.mrf.mxu0
    %v763 = vadd.f32 %v684, %v762
    %v764 = vpop.f32.mrf.mxu0
    %765 = vdwg.mxu0
    %v766 = vadd.f32 %v175, %v758
    %v767 = vadd.f32 %v180, %v763
    %v768 = vld [vmem:[#allocation2 + $0x163] sm:$0x1]
    %v769 = vld [vmem:[#allocation2 + $0x164] sm:$0x1]
    %v770 = vsel %vm192, %v766, 0.0
    %771 = vadd.xlane.f32.xlu0 %v770
    %v772 = vpop.xlane.xlu0 %771
    %v773 = vsel %vm192, %v767, 0.0
    %774 = vadd.xlane.f32.xlu0 %v773
    %v775 = vpop.xlane.xlu0 %774
    %v776 = vrcp.pop 32.0
    %v777 = vmul.f32 %v772, %v776
    %v778 = vmul.f32 %v775, %v776
    %v779 = vsub.f32 %v766, %v777
    %v780 = vsub.f32 %v767, %v778
    %v781 = vmul.f32 %v779, %v779
    %v782 = vmul.f32 %v780, %v780
    %v783 = vsel %vm192, %v781, 0.0
    %784 = vadd.xlane.f32.xlu0 %v783
    %v785 = vpop.xlane.xlu0 %784
    %v786 = vsel %vm192, %v782, 0.0
    %787 = vadd.xlane.f32.xlu0 %v786
    %v788 = vpop.xlane.xlu0 %787
    %v789 = vmul.f32 %v785, %v776
    %v790 = vmul.f32 %v788, %v776
    %v791 = vadd.f32 %v789, 1e-05
    %v792 = vadd.f32 %v790, 1e-05
    %v793 = vrsqrt.pop %v791
    %v794 = vrsqrt.pop %v792
    %v795 = vmul.f32 %v779, %v793
    %v796 = vmul.f32 %v780, %v794
    %v797 = vlaneseq
    %v798 = vshrl.u32 %v797, 7
    %v799 = vsub.s32 0, %v798
    %v800 = vrot.slane %v768, %v799
    %v801 = vmul.f32 %v795, %v800
    %v802 = vmul.f32 %v796, %v800
    %v803 = vlaneseq
    %v804 = vshrl.u32 %v803, 7
    %v805 = vsub.s32 0, %v804
    %v806 = vrot.slane %v769, %v805
    %v807 = vadd.f32 %v801, %v806
    %v808 = vadd.f32 %v802, %v806
    %v809 = vld [vmem:[#allocation2 + $0x50] sm:$0xff]
    %v810 = vld [vmem:[#allocation2 + $0x58] sm:$0xff]
    %v811 = vld [vmem:[#allocation2 + $0x60] sm:$0xff]
    %v812 = vld [vmem:[#allocation2 + $0x68] sm:$0xff]
    %v813 = vld [vmem:[#allocation2 + $0x165] sm:$0x1]
    %v814 = vlaneseq
    %v815 = vshrl.u32 %v814, 7
    %v816 = vsub.s32 0, %v815
    %v817 = vrot.slane %v813, %v816
    %v819 = vsel %vm192, %v807, 0
    %v822 = vsel %vm192, %v808, 0
    %824 = vmatprep.subr.mxu0 0.0
    %825 = vmatpush1.msra.mxu0 0.0
    %826 = vmatprep.subr.mxu0 0.0
    %827 = vmatpush1.msra.mxu0 0.0
    %828 = vmatprep.subr.mxu0 0.0
    %829 = vmatpush1.msra.mxu0 0.0
    %830 = vmatprep.subr.mxu0 0.0
    %831 = vmatpush1.msra.mxu0 0.0
    %832 = vmatprep.subr.mxu0 0.0
    %833 = vmatpush1.msra.mxu0 0.0
    %834 = vmatprep.subr.mxu0 0.0
    %835 = vmatpush1.msra.mxu0 0.0
    %836 = vmatprep.subr.mxu0 0.0
    %837 = vmatpush1.msra.mxu0 0.0
    %838 = vmatprep.subr.mxu0 0.0
    %839 = vmatpush1.msra.mxu0 0.0
    %840 = vmatprep.subr.mxu0 0.0
    %841 = vmatpush1.msra.mxu0 0.0
    %842 = vmatprep.subr.mxu0 0.0
    %843 = vmatpush1.msra.mxu0 0.0
    %844 = vmatprep.subr.mxu0 0.0
    %845 = vmatpush1.msra.mxu0 0.0
    %846 = vmatprep.subr.mxu0 0.0
    %847 = vmatpush1.msra.mxu0 0.0
    %848 = vmatprep.subr.mxu0 0.0
    %849 = vmatpush1.msra.mxu0 %v812
    %850 = vmatprep.subr.mxu0 0.0
    %851 = vmatpush1.msra.mxu0 %v811
    %852 = vmatprep.subr.mxu0 0.0
    %853 = vmatpush1.msra.mxu0 %v810
    %854 = vmatprep.subr.mxu0 0.0
    %855 = vmatpush1.msra.mxu0 %v809
    %856 = vmatprep.subr.mxu0 0.0
    %857 = vmatpush2.msra.mxu0 0.0
    %858 = vmatprep.subr.mxu0 0.0
    %859 = vmatpush2.msra.mxu0 0.0
    %860 = vmatprep.subr.mxu0 0.0
    %861 = vmatpush2.msra.mxu0 0.0
    %862 = vmatprep.subr.mxu0 0.0
    %863 = vmatpush2.msra.mxu0 0.0
    %864 = vmatprep.subr.mxu0 0.0
    %865 = vmatpush2.msra.mxu0 0.0
    %866 = vmatprep.subr.mxu0 0.0
    %867 = vmatpush2.msra.mxu0 0.0
    %868 = vmatprep.subr.mxu0 0.0
    %869 = vmatpush2.msra.mxu0 0.0
    %870 = vmatprep.subr.mxu0 0.0
    %871 = vmatpush2.msra.mxu0 0.0
    %872 = vmatprep.subr.mxu0 0.0
    %873 = vmatpush2.msra.mxu0 0.0
    %874 = vmatprep.subr.mxu0 0.0
    %875 = vmatpush2.msra.mxu0 0.0
    %876 = vmatprep.subr.mxu0 0.0
    %877 = vmatpush2.msra.mxu0 0.0
    %878 = vmatprep.subr.mxu0 0.0
    %879 = vmatpush2.msra.mxu0 0.0
    %880 = vmatprep.subr.mxu0 0.0
    %881 = vmatpush2.msra.mxu0 0.0
    %882 = vmatprep.subr.mxu0 0.0
    %883 = vmatpush2.msra.mxu0 0.0
    %884 = vmatprep.subr.mxu0 0.0
    %885 = vmatpush2.msra.mxu0 0.0
    %886 = vmatprep.subr.mxu0 0.0
    %887 = vmatpush2.msra.mxu0 0.0
    %888 = vmatprep.mubr.f32.mxu0 0.0
    %889 = vmatmul.mubr.f32.gmra.mxu0 %v819
    %v890 = vpop.f32.mrf.mxu0
    %v891 = vadd.f32 %v817, %v890
    %v892 = vpop.f32.mrf.mxu0
    %893 = vmatprep.mubr.f32.mxu0 0.0
    %894 = vmatmul.mubr.f32.gmra.mxu0 %v822
    %v895 = vpop.f32.mrf.mxu0
    %v896 = vadd.f32 %v817, %v895
    %v897 = vpop.f32.mrf.mxu0
    %898 = vdwg.mxu0
    %v899 = vmax.f32 %v891, 0.0
    %v900 = vmax.f32 %v896, 0.0
    %v901 = vld [vmem:[#allocation2 + $0x70] sm:$0xff]
    %v902 = vld [vmem:[#allocation2 + $0x78] sm:$0xff]
    %v903 = vld [vmem:[#allocation2 + $0x80] sm:$0xff]
    %v904 = vld [vmem:[#allocation2 + $0x88] sm:$0xff]
    %v905 = vld [vmem:[#allocation2 + $0x90] sm:$0xff]
    %v906 = vld [vmem:[#allocation2 + $0x98] sm:$0xff]
    %v907 = vld [vmem:[#allocation2 + $0xa0] sm:$0xff]
    %v908 = vld [vmem:[#allocation2 + $0xa8] sm:$0xff]
    %v909 = vld [vmem:[#allocation2 + $0x166] sm:$0x1]
    %v910 = vlaneseq
    %v911 = vshrl.u32 %v910, 7
    %v912 = vsub.s32 0, %v911
    %v913 = vrot.slane %v909, %v912
    %v915 = vsel %vm483, %v899, 0
    %v918 = vsel %vm483, %v900, 0
    %920 = vmatprep.subr.mxu0 0.0
    %921 = vmatpush1.msra.mxu0 0.0
    %922 = vmatprep.subr.mxu0 0.0
    %923 = vmatpush1.msra.mxu0 0.0
    %924 = vmatprep.subr.mxu0 0.0
    %925 = vmatpush1.msra.mxu0 0.0
    %926 = vmatprep.subr.mxu0 0.0
    %927 = vmatpush1.msra.mxu0 0.0
    %928 = vmatprep.subr.mxu0 0.0
    %929 = vmatpush1.msra.mxu0 0.0
    %930 = vmatprep.subr.mxu0 0.0
    %931 = vmatpush1.msra.mxu0 0.0
    %932 = vmatprep.subr.mxu0 0.0
    %933 = vmatpush1.msra.mxu0 0.0
    %934 = vmatprep.subr.mxu0 0.0
    %935 = vmatpush1.msra.mxu0 0.0
    %936 = vmatprep.subr.mxu0 0.0
    %937 = vmatpush1.msra.mxu0 %v908
    %938 = vmatprep.subr.mxu0 0.0
    %939 = vmatpush1.msra.mxu0 %v907
    %940 = vmatprep.subr.mxu0 0.0
    %941 = vmatpush1.msra.mxu0 %v906
    %942 = vmatprep.subr.mxu0 0.0
    %943 = vmatpush1.msra.mxu0 %v905
    %944 = vmatprep.subr.mxu0 0.0
    %945 = vmatpush1.msra.mxu0 %v904
    %946 = vmatprep.subr.mxu0 0.0
    %947 = vmatpush1.msra.mxu0 %v903
    %948 = vmatprep.subr.mxu0 0.0
    %949 = vmatpush1.msra.mxu0 %v902
    %950 = vmatprep.subr.mxu0 0.0
    %951 = vmatpush1.msra.mxu0 %v901
    %952 = vmatprep.subr.mxu0 0.0
    %953 = vmatpush2.msra.mxu0 0.0
    %954 = vmatprep.subr.mxu0 0.0
    %955 = vmatpush2.msra.mxu0 0.0
    %956 = vmatprep.subr.mxu0 0.0
    %957 = vmatpush2.msra.mxu0 0.0
    %958 = vmatprep.subr.mxu0 0.0
    %959 = vmatpush2.msra.mxu0 0.0
    %960 = vmatprep.subr.mxu0 0.0
    %961 = vmatpush2.msra.mxu0 0.0
    %962 = vmatprep.subr.mxu0 0.0
    %963 = vmatpush2.msra.mxu0 0.0
    %964 = vmatprep.subr.mxu0 0.0
    %965 = vmatpush2.msra.mxu0 0.0
    %966 = vmatprep.subr.mxu0 0.0
    %967 = vmatpush2.msra.mxu0 0.0
    %968 = vmatprep.subr.mxu0 0.0
    %969 = vmatpush2.msra.mxu0 0.0
    %970 = vmatprep.subr.mxu0 0.0
    %971 = vmatpush2.msra.mxu0 0.0
    %972 = vmatprep.subr.mxu0 0.0
    %973 = vmatpush2.msra.mxu0 0.0
    %974 = vmatprep.subr.mxu0 0.0
    %975 = vmatpush2.msra.mxu0 0.0
    %976 = vmatprep.subr.mxu0 0.0
    %977 = vmatpush2.msra.mxu0 0.0
    %978 = vmatprep.subr.mxu0 0.0
    %979 = vmatpush2.msra.mxu0 0.0
    %980 = vmatprep.subr.mxu0 0.0
    %981 = vmatpush2.msra.mxu0 0.0
    %982 = vmatprep.subr.mxu0 0.0
    %983 = vmatpush2.msra.mxu0 0.0
    %984 = vmatprep.mubr.f32.mxu0 0.0
    %985 = vmatmul.mubr.f32.gmra.mxu0 %v915
    %v986 = vpop.f32.mrf.mxu0
    %v987 = vadd.f32 %v913, %v986
    %v988 = vpop.f32.mrf.mxu0
    %989 = vmatprep.mubr.f32.mxu0 0.0
    %990 = vmatmul.mubr.f32.gmra.mxu0 %v918
    %v991 = vpop.f32.mrf.mxu0
    %v992 = vadd.f32 %v913, %v991
    %v993 = vpop.f32.mrf.mxu0
    %994 = vdwg.mxu0
    %v995 = vadd.f32 %v807, %v987
    %v996 = vadd.f32 %v808, %v992
    %v997 = vld [vmem:[#allocation2 + $0x167] sm:$0x1]
    %v998 = vld [vmem:[#allocation2 + $0x168] sm:$0x1]
    %v999 = vsel %vm192, %v995, 0.0
    %1000 = vadd.xlane.f32.xlu0 %v999
    %v1001 = vpop.xlane.xlu0 %1000
    %v1002 = vsel %vm192, %v996, 0.0
    %1003 = vadd.xlane.f32.xlu0 %v1002
    %v1004 = vpop.xlane.xlu0 %1003
    %v1005 = vmul.f32 %v1001, %v776
    %v1006 = vmul.f32 %v1004, %v776
    %v1007 = vsub.f32 %v995, %v1005
    %v1008 = vsub.f32 %v996, %v1006
    %v1009 = vmul.f32 %v1007, %v1007
    %v1010 = vmul.f32 %v1008, %v1008
    %v1011 = vsel %vm192, %v1009, 0.0
    %1012 = vadd.xlane.f32.xlu0 %v1011
    %v1013 = vpop.xlane.xlu0 %1012
    %v1014 = vsel %vm192, %v1010, 0.0
    %1015 = vadd.xlane.f32.xlu0 %v1014
    %v1016 = vpop.xlane.xlu0 %1015
    %v1017 = vmul.f32 %v1013, %v776
    %v1018 = vmul.f32 %v1016, %v776
    %v1019 = vadd.f32 %v1017, 1e-05
    %v1020 = vadd.f32 %v1018, 1e-05
    %v1021 = vrsqrt.pop %v1019
    %v1022 = vrsqrt.pop %v1020
    %v1023 = vmul.f32 %v1007, %v1021
    %v1024 = vmul.f32 %v1008, %v1022
    %v1025 = vlaneseq
    %v1026 = vshrl.u32 %v1025, 7
    %v1027 = vsub.s32 0, %v1026
    %v1028 = vrot.slane %v997, %v1027
    %v1029 = vmul.f32 %v1023, %v1028
    %v1030 = vmul.f32 %v1024, %v1028
    %v1031 = vlaneseq
    %v1032 = vshrl.u32 %v1031, 7
    %v1033 = vsub.s32 0, %v1032
    %v1034 = vrot.slane %v998, %v1033
    %v1035 = vadd.f32 %v1029, %v1034
    %v1036 = vadd.f32 %v1030, %v1034
    %v1037 = vld [vmem:[#allocation2 + $0xb0] sm:$0xff]
    %v1038 = vld [vmem:[#allocation2 + $0xb8] sm:$0xff]
    %v1039 = vld [vmem:[#allocation2 + $0xc0] sm:$0xff]
    %v1040 = vld [vmem:[#allocation2 + $0xc8] sm:$0xff]
    %v1041 = vld [vmem:[#allocation2 + $0x169] sm:$0x1]
    %v1042 = vlaneseq
    %v1043 = vshrl.u32 %v1042, 7
    %v1044 = vsub.s32 0, %v1043
    %v1045 = vrot.slane %v1041, %v1044
    %v1047 = vsel %vm192, %v1035, 0
    %v1050 = vsel %vm192, %v1036, 0
    %1052 = vmatprep.subr.mxu0 0.0
    %1053 = vmatpush1.msra.mxu0 0.0
    %1054 = vmatprep.subr.mxu0 0.0
    %1055 = vmatpush1.msra.mxu0 0.0
    %1056 = vmatprep.subr.mxu0 0.0
    %1057 = vmatpush1.msra.mxu0 0.0
    %1058 = vmatprep.subr.mxu0 0.0
    %1059 = vmatpush1.msra.mxu0 0.0
    %1060 = vmatprep.subr.mxu0 0.0
    %1061 = vmatpush1.msra.mxu0 0.0
    %1062 = vmatprep.subr.mxu0 0.0
    %1063 = vmatpush1.msra.mxu0 0.0
    %1064 = vmatprep.subr.mxu0 0.0
    %1065 = vmatpush1.msra.mxu0 0.0
    %1066 = vmatprep.subr.mxu0 0.0
    %1067 = vmatpush1.msra.mxu0 0.0
    %1068 = vmatprep.subr.mxu0 0.0
    %1069 = vmatpush1.msra.mxu0 0.0
    %1070 = vmatprep.subr.mxu0 0.0
    %1071 = vmatpush1.msra.mxu0 0.0
    %1072 = vmatprep.subr.mxu0 0.0
    %1073 = vmatpush1.msra.mxu0 0.0
    %1074 = vmatprep.subr.mxu0 0.0
    %1075 = vmatpush1.msra.mxu0 0.0
    %1076 = vmatprep.subr.mxu0 0.0
    %1077 = vmatpush1.msra.mxu0 %v1040
    %1078 = vmatprep.subr.mxu0 0.0
    %1079 = vmatpush1.msra.mxu0 %v1039
    %1080 = vmatprep.subr.mxu0 0.0
    %1081 = vmatpush1.msra.mxu0 %v1038
    %1082 = vmatprep.subr.mxu0 0.0
    %1083 = vmatpush1.msra.mxu0 %v1037
    %1084 = vmatprep.subr.mxu0 0.0
    %1085 = vmatpush2.msra.mxu0 0.0
    %1086 = vmatprep.subr.mxu0 0.0
    %1087 = vmatpush2.msra.mxu0 0.0
    %1088 = vmatprep.subr.mxu0 0.0
    %1089 = vmatpush2.msra.mxu0 0.0
    %1090 = vmatprep.subr.mxu0 0.0
    %1091 = vmatpush2.msra.mxu0 0.0
    %1092 = vmatprep.subr.mxu0 0.0
    %1093 = vmatpush2.msra.mxu0 0.0
    %1094 = vmatprep.subr.mxu0 0.0
    %1095 = vmatpush2.msra.mxu0 0.0
    %1096 = vmatprep.subr.mxu0 0.0
    %1097 = vmatpush2.msra.mxu0 0.0
    %1098 = vmatprep.subr.mxu0 0.0
    %1099 = vmatpush2.msra.mxu0 0.0
    %1100 = vmatprep.subr.mxu0 0.0
    %1101 = vmatpush2.msra.mxu0 0.0
    %1102 = vmatprep.subr.mxu0 0.0
    %1103 = vmatpush2.msra.mxu0 0.0
    %1104 = vmatprep.subr.mxu0 0.0
    %1105 = vmatpush2.msra.mxu0 0.0
    %1106 = vmatprep.subr.mxu0 0.0
    %1107 = vmatpush2.msra.mxu0 0.0
    %1108 = vmatprep.subr.mxu0 0.0
    %1109 = vmatpush2.msra.mxu0 0.0
    %1110 = vmatprep.subr.mxu0 0.0
    %1111 = vmatpush2.msra.mxu0 0.0
    %1112 = vmatprep.subr.mxu0 0.0
    %1113 = vmatpush2.msra.mxu0 0.0
    %1114 = vmatprep.subr.mxu0 0.0
    %1115 = vmatpush2.msra.mxu0 0.0
    %1116 = vmatprep.mubr.f32.mxu0 0.0
    %1117 = vmatmul.mubr.f32.gmra.mxu0 %v1047
    %v1118 = vpop.f32.mrf.mxu0
    %v1119 = vadd.f32 %v1045, %v1118
    %v1120 = vpop.f32.mrf.mxu0
    %1121 = vmatprep.mubr.f32.mxu0 0.0
    %1122 = vmatmul.mubr.f32.gmra.mxu0 %v1050
    %v1123 = vpop.f32.mrf.mxu0
    %v1124 = vadd.f32 %v1045, %v1123
    %v1125 = vpop.f32.mrf.mxu0
    %1126 = vdwg.mxu0
    %v1127 = vmax.f32 %v1119, 0.0
    %v1128 = vmax.f32 %v1124, 0.0
    %v1129 = vld [vmem:[#allocation2 + $0xd0] sm:$0xff]
    %v1130 = vld [vmem:[#allocation2 + $0xd8] sm:$0xff]
    %v1131 = vld [vmem:[#allocation2 + $0xe0] sm:$0xff]
    %v1132 = vld [vmem:[#allocation2 + $0xe8] sm:$0xff]
    %v1133 = vld [vmem:[#allocation2 + $0x16a] sm:$0x1]
    %v1134 = vlaneseq
    %v1135 = vshrl.u32 %v1134, 7
    %v1136 = vsub.s32 0, %v1135
    %v1137 = vrot.slane %v1133, %v1136
    %v1139 = vsel %vm192, %v1127, 0
    %v1142 = vsel %vm192, %v1128, 0
    %1144 = vmatprep.subr.mxu0 0.0
    %1145 = vmatpush1.msra.mxu0 0.0
    %1146 = vmatprep.subr.mxu0 0.0
    %1147 = vmatpush1.msra.mxu0 0.0
    %1148 = vmatprep.subr.mxu0 0.0
    %1149 = vmatpush1.msra.mxu0 0.0
    %1150 = vmatprep.subr.mxu0 0.0
    %1151 = vmatpush1.msra.mxu0 0.0
    %1152 = vmatprep.subr.mxu0 0.0
    %1153 = vmatpush1.msra.mxu0 0.0
    %1154 = vmatprep.subr.mxu0 0.0
    %1155 = vmatpush1.msra.mxu0 0.0
    %1156 = vmatprep.subr.mxu0 0.0
    %1157 = vmatpush1.msra.mxu0 0.0
    %1158 = vmatprep.subr.mxu0 0.0
    %1159 = vmatpush1.msra.mxu0 0.0
    %1160 = vmatprep.subr.mxu0 0.0
    %1161 = vmatpush1.msra.mxu0 0.0
    %1162 = vmatprep.subr.mxu0 0.0
    %1163 = vmatpush1.msra.mxu0 0.0
    %1164 = vmatprep.subr.mxu0 0.0
    %1165 = vmatpush1.msra.mxu0 0.0
    %1166 = vmatprep.subr.mxu0 0.0
    %1167 = vmatpush1.msra.mxu0 0.0
    %1168 = vmatprep.subr.mxu0 0.0
    %1169 = vmatpush1.msra.mxu0 %v1132
    %1170 = vmatprep.subr.mxu0 0.0
    %1171 = vmatpush1.msra.mxu0 %v1131
    %1172 = vmatprep.subr.mxu0 0.0
    %1173 = vmatpush1.msra.mxu0 %v1130
    %1174 = vmatprep.subr.mxu0 0.0
    %1175 = vmatpush1.msra.mxu0 %v1129
    %1176 = vmatprep.subr.mxu0 0.0
    %1177 = vmatpush2.msra.mxu0 0.0
    %1178 = vmatprep.subr.mxu0 0.0
    %1179 = vmatpush2.msra.mxu0 0.0
    %1180 = vmatprep.subr.mxu0 0.0
    %1181 = vmatpush2.msra.mxu0 0.0
    %1182 = vmatprep.subr.mxu0 0.0
    %1183 = vmatpush2.msra.mxu0 0.0
    %1184 = vmatprep.subr.mxu0 0.0
    %1185 = vmatpush2.msra.mxu0 0.0
    %1186 = vmatprep.subr.mxu0 0.0
    %1187 = vmatpush2.msra.mxu0 0.0
    %1188 = vmatprep.subr.mxu0 0.0
    %1189 = vmatpush2.msra.mxu0 0.0
    %1190 = vmatprep.subr.mxu0 0.0
    %1191 = vmatpush2.msra.mxu0 0.0
    %1192 = vmatprep.subr.mxu0 0.0
    %1193 = vmatpush2.msra.mxu0 0.0
    %1194 = vmatprep.subr.mxu0 0.0
    %1195 = vmatpush2.msra.mxu0 0.0
    %1196 = vmatprep.subr.mxu0 0.0
    %1197 = vmatpush2.msra.mxu0 0.0
    %1198 = vmatprep.subr.mxu0 0.0
    %1199 = vmatpush2.msra.mxu0 0.0
    %1200 = vmatprep.subr.mxu0 0.0
    %1201 = vmatpush2.msra.mxu0 0.0
    %1202 = vmatprep.subr.mxu0 0.0
    %1203 = vmatpush2.msra.mxu0 0.0
    %1204 = vmatprep.subr.mxu0 0.0
    %1205 = vmatpush2.msra.mxu0 0.0
    %1206 = vmatprep.subr.mxu0 0.0
    %1207 = vmatpush2.msra.mxu0 0.0
    %1208 = vmatprep.mubr.f32.mxu0 0.0
    %1209 = vmatmul.mubr.f32.gmra.mxu0 %v1139
    %v1210 = vpop.f32.mrf.mxu0
    %v1211 = vadd.f32 %v1137, %v1210
    %v1212 = vpop.f32.mrf.mxu0
    %1213 = vmatprep.mubr.f32.mxu0 0.0
    %1214 = vmatmul.mubr.f32.gmra.mxu0 %v1142
    %v1215 = vpop.f32.mrf.mxu0
    %v1216 = vadd.f32 %v1137, %v1215
    %v1217 = vpop.f32.mrf.mxu0
    %1218 = vdwg.mxu0
    %v1219 = vmax.f32 %v1211, 0.0
    %v1220 = vmax.f32 %v1216, 0.0
    %v1221 = vld [vmem:[#allocation2 + $0xf0] sm:$0xff]
    %v1222 = vld [vmem:[#allocation2 + $0xf8] sm:$0xff]
    %v1223 = vld [vmem:[#allocation2 + $0x100] sm:$0xff]
    %v1224 = vld [vmem:[#allocation2 + $0x108] sm:$0xff]
    %v1225 = vld [vmem:[#allocation2 + $0x16b] sm:$0x1]
    %v1226 = vlaneseq
    %v1227 = vshrl.u32 %v1226, 7
    %v1228 = vsub.s32 0, %v1227
    %v1229 = vrot.slane %v1225, %v1228
    %v1231 = vsel %vm192, %v1219, 0
    %v1234 = vsel %vm192, %v1220, 0
    %1236 = vmatprep.subr.mxu0 0.0
    %1237 = vmatpush1.msra.mxu0 0.0
    %1238 = vmatprep.subr.mxu0 0.0
    %1239 = vmatpush1.msra.mxu0 0.0
    %1240 = vmatprep.subr.mxu0 0.0
    %1241 = vmatpush1.msra.mxu0 0.0
    %1242 = vmatprep.subr.mxu0 0.0
    %1243 = vmatpush1.msra.mxu0 0.0
    %1244 = vmatprep.subr.mxu0 0.0
    %1245 = vmatpush1.msra.mxu0 0.0
    %1246 = vmatprep.subr.mxu0 0.0
    %1247 = vmatpush1.msra.mxu0 0.0
    %1248 = vmatprep.subr.mxu0 0.0
    %1249 = vmatpush1.msra.mxu0 0.0
    %1250 = vmatprep.subr.mxu0 0.0
    %1251 = vmatpush1.msra.mxu0 0.0
    %1252 = vmatprep.subr.mxu0 0.0
    %1253 = vmatpush1.msra.mxu0 0.0
    %1254 = vmatprep.subr.mxu0 0.0
    %1255 = vmatpush1.msra.mxu0 0.0
    %1256 = vmatprep.subr.mxu0 0.0
    %1257 = vmatpush1.msra.mxu0 0.0
    %1258 = vmatprep.subr.mxu0 0.0
    %1259 = vmatpush1.msra.mxu0 0.0
    %1260 = vmatprep.subr.mxu0 0.0
    %1261 = vmatpush1.msra.mxu0 %v1224
    %1262 = vmatprep.subr.mxu0 0.0
    %1263 = vmatpush1.msra.mxu0 %v1223
    %1264 = vmatprep.subr.mxu0 0.0
    %1265 = vmatpush1.msra.mxu0 %v1222
    %1266 = vmatprep.subr.mxu0 0.0
    %1267 = vmatpush1.msra.mxu0 %v1221
    %1268 = vmatprep.subr.mxu0 0.0
    %1269 = vmatpush2.msra.mxu0 0.0
    %1270 = vmatprep.subr.mxu0 0.0
    %1271 = vmatpush2.msra.mxu0 0.0
    %1272 = vmatprep.subr.mxu0 0.0
    %1273 = vmatpush2.msra.mxu0 0.0
    %1274 = vmatprep.subr.mxu0 0.0
    %1275 = vmatpush2.msra.mxu0 0.0
    %1276 = vmatprep.subr.mxu0 0.0
    %1277 = vmatpush2.msra.mxu0 0.0
    %1278 = vmatprep.subr.mxu0 0.0
    %1279 = vmatpush2.msra.mxu0 0.0
    %1280 = vmatprep.subr.mxu0 0.0
    %1281 = vmatpush2.msra.mxu0 0.0
    %1282 = vmatprep.subr.mxu0 0.0
    %1283 = vmatpush2.msra.mxu0 0.0
    %1284 = vmatprep.subr.mxu0 0.0
    %1285 = vmatpush2.msra.mxu0 0.0
    %1286 = vmatprep.subr.mxu0 0.0
    %1287 = vmatpush2.msra.mxu0 0.0
    %1288 = vmatprep.subr.mxu0 0.0
    %1289 = vmatpush2.msra.mxu0 0.0
    %1290 = vmatprep.subr.mxu0 0.0
    %1291 = vmatpush2.msra.mxu0 0.0
    %1292 = vmatprep.subr.mxu0 0.0
    %1293 = vmatpush2.msra.mxu0 0.0
    %1294 = vmatprep.subr.mxu0 0.0
    %1295 = vmatpush2.msra.mxu0 0.0
    %1296 = vmatprep.subr.mxu0 0.0
    %1297 = vmatpush2.msra.mxu0 0.0
    %1298 = vmatprep.subr.mxu0 0.0
    %1299 = vmatpush2.msra.mxu0 0.0
    %1300 = vmatprep.mubr.f32.mxu0 0.0
    %1301 = vmatmul.mubr.f32.gmra.mxu0 %v1231
    %v1302 = vpop.f32.mrf.mxu0
    %v1303 = vadd.f32 %v1229, %v1302
    %v1304 = vpop.f32.mrf.mxu0
    %1305 = vmatprep.mubr.f32.mxu0 0.0
    %1306 = vmatmul.mubr.f32.gmra.mxu0 %v1234
    %v1307 = vpop.f32.mrf.mxu0
    %v1308 = vadd.f32 %v1229, %v1307
    %v1309 = vpop.f32.mrf.mxu0
    %1310 = vdwg.mxu0
    %vm1311 = vcmask 769024
    %1312 = vst.msk [vmem:[#allocation5] sm:$0xff] %vm1311, %v1303
    %1313 = vst.msk [vmem:[#allocation5 + $0x8] sm:$0xff] %vm1311, %v1308
    // Predicated region
    $region14: #{classifier_forward.1} parent=1 // pred_check
      _
    $region15: #{classifier_forward.1} parent=1 // pred_check_branch
      %1315 = sbr.rel (0) target = $region17
    $region16: #{classifier_forward.1} parent=1 // pred_region
      %s1317 = ssub.s32 256, 256
      %1318 = vsyncadd [#allocation4], %s1317
      %s1319 = sshll.u32 [#allocation5], 4
      %s1320 = int_to_ptr.vmem [resolvable:$true] %s1319
      %1325 = dma.vmem_to_hbm [thread:$0]  %s1320, 256, %s2, [#allocation4], 128, 128, 8
    $region17: #{classifier_forward.1} parent=1 // pred_fallthru
      _
    // Predicated region
    $region18: #{classifier_forward.1} parent=1 // pred_check
      _
    $region19: #{classifier_forward.1} parent=1 // pred_check_branch
      %1327 = sbr.rel (0) target = $region21
    $region20: #{classifier_forward.1} parent=1 // pred_region
      %1328 = dma.done [#allocation4], 256
    $region21: #{classifier_forward.1} parent=1 // pred_fallthru
      _
    %1329 = vsyncpa [#allocation3], 1
    %1330 = vsyncpa [#allocation4], 1

</llo_original>
